<compile_context>
chip_gen: v7x
topology: tpu7x:2x2x1
jax: 0.10.0
libtpu: 0.0.40
codegen_flags: <defaults>
</compile_context>

<pallas_src>
import functools

import jax
import jax.numpy as jnp
from jax.experimental import pallas as pl
from jax.experimental.pallas import tpu as pltpu

KH = KW = 3
PAD = 1            # stride=1, padding=1
LANE = 128         # minimum lane-dense Cout tile
TARGET_M = 256     # target MXU M-dim (rows of the per-step matmul) = TH * W


def _pick_vmem_limit(default=48 * 1024 * 1024):
    """Generation-aware scoped-VMEM budget (~3/4 of physical VMEM, capped)."""
    get_info = getattr(pltpu, "get_tpu_info", None)
    if get_info is None:
        return default
    try:
        cap = getattr(get_info(), "vmem_capacity_bytes", 0) or 0
    except Exception:
        return default
    if cap <= 0:
        return default
    return int(min(cap * 3 // 4, 100 * 1024 * 1024))


def _conv_bn_stats_kernel(x_ref, w_ref, y_ref, stats_ref, acc_ref, *, fold_kw, h_valid):
    # x_ref:     folded: (1, H_t+2, W, KW*Cin) ; unfolded: (1, H_t+2, W+2, Cin)
    # w_ref:     (KH, KW*Cin, CT)    weight tile for this Cout tile (resident across all rows)
    # y_ref:     (1, TH, W, CT)      conv output row-tile (lane-dense, compute dtype)
    # stats_ref: (1, 1, 2, CT)       per-channel [sum, sum_sq] for this (n, row-tile, ct)
    # acc_ref:   (TH, W, CT) f32     VMEM scratch accumulator
    _, th, w_out, _ = y_ref.shape
    row0 = pl.multiple_of(pl.program_id(2) * th, th)

    first = True
    for kh in range(KH):
        if fold_kw:
            # KW folded into the contraction: one (TH*W, KW*Cin) x (KW*Cin, CT) matmul per kh.
            taps = [(x_ref[0, pl.ds(row0 + kh, th), :, :], w_ref[kh])]
        else:
            # Fallback for large Cin: 9 shifted taps (kw slices offset the sublane axis).
            cin = x_ref.shape[-1]
            taps = [(x_ref[0, pl.ds(row0 + kh, th), pl.ds(kw, w_out), :],
                     w_ref[kh, kw * cin:(kw + 1) * cin, :])
                    for kw in range(KW)]
        for patch, w_tap in taps:
            contrib = jnp.dot(patch, w_tap, preferred_element_type=jnp.float32)
            if first:
                acc_ref[...] = contrib
                first = False
            else:
                acc_ref[...] += contrib

    acc = acc_ref[...]
    y_ref[...] = acc[None].astype(y_ref.dtype)

    # Fused partial BatchNorm statistics; rows added by the H padding are masked out.
    if h_valid is not None:
        row_ids = jax.lax.broadcasted_iota(jnp.int32, acc.shape, 0) + row0
        acc = jnp.where(row_ids < h_valid, acc, 0.0)
    flat = acc.reshape(-1, acc.shape[-1])
    s1 = jnp.sum(flat, axis=0, keepdims=True)            # (1, CT)
    s2 = jnp.sum(flat * flat, axis=0, keepdims=True)     # (1, CT)
    stats_ref[...] = jnp.concatenate([s1, s2], axis=0).reshape(stats_ref.shape)


def _bn_relu_kernel(y_ref, scale_ref, shift_ref, o_ref):
    # y_ref/o_ref: (TR, CB) lane-dense blocks; scale/shift: (1, CB), resident per channel tile.
    y = y_ref[...].astype(jnp.float32)
    o_ref[...] = jnp.maximum(y * scale_ref[...] + shift_ref[...], 0.0).astype(o_ref.dtype)


@functools.partial(jax.jit, static_argnames=("eps", "compute_dtype"))
def basic_conv2d(x_nchw, weight_oihw, gamma, beta, *, eps=1e-3,
                 compute_dtype=jnp.bfloat16):
    N, Cin, H, W = x_nchw.shape
    Cout = weight_oihw.shape[0]
    assert weight_oihw.shape[1:] == (Cin, KH, KW)
    out_dtype = x_nchw.dtype

    Cout_p = ((Cout + LANE - 1) // LANE) * LANE
    CT = 256 if Cout_p % 256 == 0 else LANE        # wider Cout tile feeds v6e/v7x 256-wide MXU
    n_ct = Cout_p // CT

    # Row tile: target TH*W ~ TARGET_M; pad H so TH is not hostage to H's divisors.
    TH = max(1, min(H, -(-TARGET_M // W)))
    R = -(-H // TH)
    H_t = R * TH
    pad_h = H_t - H

    fold_kw = Cin <= 64            # fold KW into the contraction for small-Cin layers

    # ---- wrapper-side layout prep (fused XLA passes) ----
    x = jnp.transpose(x_nchw, (0, 2, 3, 1))                                    # NHWC
    xp = jnp.pad(x, ((0, 0), (PAD, PAD + pad_h), (PAD, PAD), (0, 0))).astype(compute_dtype)
    if fold_kw:
        # Pre-gather the KW taps into the channel dim: (N, H_t+2, W, KW*Cin).
        x_in = jnp.concatenate([xp[:, :, kw:kw + W, :] for kw in range(KW)], axis=-1)
        x_block = (1, H_t + 2 * PAD, W, KW * Cin)
    else:
        x_in = xp
        x_block = (1, H_t + 2 * PAD, W + 2 * PAD, Cin)

    w = jnp.transpose(weight_oihw, (2, 3, 1, 0))                               # (KH,KW,Cin,Cout)
    w = jnp.pad(w, ((0, 0), (0, 0), (0, 0), (0, Cout_p - Cout))).astype(compute_dtype)
    w_in = w.reshape(KH, KW * Cin, Cout_p)

    vmem_limit = _pick_vmem_limit()

    # ---- fused Conv2d (bias=False) + BN partial statistics ----
    # Grid order (N, Cout-tile, Row-tile): weight block resident across the innermost row axis.
    y, stats = pl.pallas_call(
        functools.partial(_conv_bn_stats_kernel, fold_kw=fold_kw,
                          h_valid=(H if pad_h else None)),
        out_shape=(
            jax.ShapeDtypeStruct((N, H_t, W, Cout_p), compute_dtype),   # bf16 intermediate
            jax.ShapeDtypeStruct((N, R, 2, Cout_p), jnp.float32),
        ),
        grid=(N, n_ct, R),
        in_specs=[
            pl.BlockSpec(x_block, lambda n, c, r: (n, 0, 0, 0)),
            pl.BlockSpec((KH, KW * Cin, CT), lambda n, c, r: (0, 0, c)),
        ],
        out_specs=(
            pl.BlockSpec((1, TH, W, CT), lambda n, c, r: (n, r, 0, c)),
            pl.BlockSpec((1, 1, 2, CT), lambda n, c, r: (n, r, 0, c)),
        ),
        scratch_shapes=[pltpu.VMEM((TH, W, CT), jnp.float32)],
        compiler_params=pltpu.CompilerParams(
            dimension_semantics=("parallel", "parallel", "parallel"),
            vmem_limit_bytes=vmem_limit,
        ),
    )(x_in, w_in)

    # ---- BatchNorm2d (training-mode, biased batch stats) scale/shift from fused stats ----
    # NOTE: single-pass E[x^2]-mean^2; clamp guards tiny negative variance from cancellation.
    cnt = float(N * H * W)
    tot = jnp.sum(stats, axis=(0, 1))                       # (2, Cout_p) f32
    mean = tot[0] / cnt
    var = jnp.maximum(tot[1] / cnt - mean * mean, 0.0)
    gamma_p = jnp.pad(gamma.astype(jnp.float32), (0, Cout_p - Cout))
    beta_p = jnp.pad(beta.astype(jnp.float32), (0, Cout_p - Cout))
    scale = gamma_p * jax.lax.rsqrt(var + eps)
    shift = beta_p - mean * scale

    # ---- fused normalize + ReLU over a lane-dense flattened view ----
    rows = N * H_t * W
    TR = rows if rows <= 1024 else 1024                     # full-dim or multiple-of-8 blocks
    CB = Cout_p if Cout_p <= 512 else 512

    y2 = y.reshape(rows, Cout_p)
    out2 = pl.pallas_call(
        _bn_relu_kernel,
        out_shape=jax.ShapeDtypeStruct((rows, Cout_p), out_dtype),
        grid=(pl.cdiv(Cout_p, CB), pl.cdiv(rows, TR)),      # channel-outer: scale/shift resident
        in_specs=[
            pl.BlockSpec((TR, CB), lambda c, i: (i, c)),
            pl.BlockSpec((1, CB), lambda c, i: (0, c)),
            pl.BlockSpec((1, CB), lambda c, i: (0, c)),
        ],
        out_specs=pl.BlockSpec((TR, CB), lambda c, i: (i, c)),
        compiler_params=pltpu.CompilerParams(
            dimension_semantics=("parallel", "parallel"),
            vmem_limit_bytes=vmem_limit,
        ),
    )(y2, scale.reshape(1, Cout_p), shift.reshape(1, Cout_p))

    # TODO(synk): the final NCHW transpose is one more full pass over the activation; drop it
    #             (or fuse into the consumer) when the caller can take NHWC directly.
    out = out2.reshape(N, H_t, W, Cout_p)[:, :H, :, :Cout]
    return jnp.transpose(out, (0, 3, 1, 2))                 # back to NCHW


if __name__ == "__main__":
    key = jax.random.PRNGKey(0)
    k1, k2, k3, k4 = jax.random.split(key, 4)

    N, Cin, H, W = 2, 4, 16, 16
    Cout = 8

    x = jax.random.normal(k1, (N, Cin, H, W), jnp.float32)
    weight = 0.1 * jax.random.normal(k2, (Cout, Cin, KH, KW), jnp.float32)   # OIHW, bias=False
    gamma = 1.0 + 0.1 * jax.random.normal(k3, (Cout,), jnp.float32)
    beta = 0.1 * jax.random.normal(k4, (Cout,), jnp.float32)

    out = basic_conv2d(x, weight, gamma, beta)
    jax.block_until_ready(out)

    assert out.shape == (N, Cout, H, W)
    assert bool(jnp.all(out >= 0.0))                         # ReLU post-condition

    # Pure-JAX f32 reference of the same forward (tolerance covers bf16 MXU + bf16 intermediate).
    y_ref = jax.lax.conv_general_dilated(
        x, weight, window_strides=(1, 1), padding=((PAD, PAD), (PAD, PAD)),
        dimension_numbers=("NCHW", "OIHW", "NCHW"))
    m = jnp.mean(y_ref, axis=(0, 2, 3), keepdims=True)
    v = jnp.mean((y_ref - m) ** 2, axis=(0, 2, 3), keepdims=True)
    ref = jnp.maximum((y_ref - m) / jnp.sqrt(v + 1e-3) * gamma.reshape(1, -1, 1, 1)
                      + beta.reshape(1, -1, 1, 1), 0.0)
    max_err = float(jnp.max(jnp.abs(out - ref)))
    assert max_err < 0.1, f"max abs err vs reference: {max_err}"

    print("KERNEL_OK")
</pallas_src>

<mosaic_0001>
module attributes {stable_mosaic.version = 11 : i64} {
  func.func @_conv_bn_stats_kernel(%arg0: i32, %arg1: i32, %arg2: i32, %arg3: memref<1x18x16x12xbf16, #tpu.memory_space<vmem>>, %arg4: memref<3x12x128xbf16, #tpu.memory_space<vmem>>, %arg5: memref<1x16x16x128xbf16, #tpu.memory_space<vmem>>, %arg6: memref<1x1x2x128xf32, #tpu.memory_space<vmem>>, %arg7: memref<16x16x128xf32, #tpu.memory_space<vmem>>) attributes {dimension_semantics = [#tpu.dimension_semantics<parallel>, #tpu.dimension_semantics<parallel>, #tpu.dimension_semantics<parallel>], iteration_bounds = array<i64: 2, 1, 1>, scalar_prefetch = 0 : i64, scratch_operands = 1 : i64, tpu.core_type = #tpu.core_type<tc>, window_params = [{transform_indices = @transform_0, window_bounds = array<i64: 1, 18, 16, 12>}, {transform_indices = @transform_1, window_bounds = array<i64: 3, 12, 128>}, {transform_indices = @transform_2, window_bounds = array<i64: 1, 16, 16, 128>}, {transform_indices = @transform_3, window_bounds = array<i64: 1, 1, 2, 128>}]} {
    %c16_i32 = arith.constant 16 : i32
    %0 = arith.muli %arg2, %c16_i32 : i32
    %1 = tpu.assume_multiple %0, 16 : i32
    %c0_i32 = arith.constant 0 : i32
    %2 = arith.addi %1, %c0_i32 : i32
    %c0 = arith.constant 0 : index
    %3 = arith.index_cast %2 : i32 to index
    %c0_0 = arith.constant 0 : index
    %c0_1 = arith.constant 0 : index
    %4 = vector.load %arg3[%c0, %3, %c0_0, %c0_1] : memref<1x18x16x12xbf16, #tpu.memory_space<vmem>>, vector<1x16x16x12xbf16>
    %5 = vector.shape_cast %4 : vector<1x16x16x12xbf16> to vector<16x16x12xbf16>
    %c0_2 = arith.constant 0 : index
    %c0_3 = arith.constant 0 : index
    %c0_4 = arith.constant 0 : index
    %6 = vector.load %arg4[%c0_2, %c0_3, %c0_4] : memref<3x12x128xbf16, #tpu.memory_space<vmem>>, vector<1x12x128xbf16>
    %7 = vector.shape_cast %6 : vector<1x12x128xbf16> to vector<12x128xbf16>
    %cst = arith.constant dense<0.000000e+00> : vector<16x16x128xf32>
    %8 = tpu.matmul %5, %7, %cst {dimension_numbers = #tpu.dot_dimension_numbers<[2], [0], [0, 1], [1], [0, 0, 0, 1, 1, 1], [], []>} : vector<16x16x12xbf16>, vector<12x128xbf16>, vector<16x16x128xf32> -> vector<16x16x128xf32>
    %c0_5 = arith.constant 0 : index
    %c0_6 = arith.constant 0 : index
    %c0_7 = arith.constant 0 : index
    %9 = vector.load %arg7[%c0_5, %c0_6, %c0_7] : memref<16x16x128xf32, #tpu.memory_space<vmem>>, vector<16x16x128xf32>
    tpu.vector_store %arg7[%c0_5, %c0_6, %c0_7], %8 {strides = array<i32>} : memref<16x16x128xf32, #tpu.memory_space<vmem>>, vector<16x16x128xf32>,
    %c1_i32 = arith.constant 1 : i32
    %10 = arith.addi %1, %c1_i32 : i32
    %c0_8 = arith.constant 0 : index
    %11 = arith.index_cast %10 : i32 to index
    %c0_9 = arith.constant 0 : index
    %c0_10 = arith.constant 0 : index
    %12 = vector.load %arg3[%c0_8, %11, %c0_9, %c0_10] : memref<1x18x16x12xbf16, #tpu.memory_space<vmem>>, vector<1x16x16x12xbf16>
    %13 = vector.shape_cast %12 : vector<1x16x16x12xbf16> to vector<16x16x12xbf16>
    %c1 = arith.constant 1 : index
    %c0_11 = arith.constant 0 : index
    %c0_12 = arith.constant 0 : index
    %14 = vector.load %arg4[%c1, %c0_11, %c0_12] : memref<3x12x128xbf16, #tpu.memory_space<vmem>>, vector<1x12x128xbf16>
    %15 = vector.shape_cast %14 : vector<1x12x128xbf16> to vector<12x128xbf16>
    %cst_13 = arith.constant dense<0.000000e+00> : vector<16x16x128xf32>
    %16 = tpu.matmul %13, %15, %cst_13 {dimension_numbers = #tpu.dot_dimension_numbers<[2], [0], [0, 1], [1], [0, 0, 0, 1, 1, 1], [], []>} : vector<16x16x12xbf16>, vector<12x128xbf16>, vector<16x16x128xf32> -> vector<16x16x128xf32>
    %c0_14 = arith.constant 0 : index
    %c0_15 = arith.constant 0 : index
    %c0_16 = arith.constant 0 : index
    %17 = vector.load %arg7[%c0_14, %c0_15, %c0_16] : memref<16x16x128xf32, #tpu.memory_space<vmem>>, vector<16x16x128xf32>
    %18 = arith.addf %17, %16 : vector<16x16x128xf32>
    %c0_17 = arith.constant 0 : index
    %c0_18 = arith.constant 0 : index
    %c0_19 = arith.constant 0 : index
    %19 = vector.load %arg7[%c0_17, %c0_18, %c0_19] : memref<16x16x128xf32, #tpu.memory_space<vmem>>, vector<16x16x128xf32>
    tpu.vector_store %arg7[%c0_17, %c0_18, %c0_19], %18 {strides = array<i32>} : memref<16x16x128xf32, #tpu.memory_space<vmem>>, vector<16x16x128xf32>,
    %c2_i32 = arith.constant 2 : i32
    %20 = arith.addi %1, %c2_i32 : i32
    %c0_20 = arith.constant 0 : index
    %21 = arith.index_cast %20 : i32 to index
    %c0_21 = arith.constant 0 : index
    %c0_22 = arith.constant 0 : index
    %22 = vector.load %arg3[%c0_20, %21, %c0_21, %c0_22] : memref<1x18x16x12xbf16, #tpu.memory_space<vmem>>, vector<1x16x16x12xbf16>
    %23 = vector.shape_cast %22 : vector<1x16x16x12xbf16> to vector<16x16x12xbf16>
    %c2 = arith.constant 2 : index
    %c0_23 = arith.constant 0 : index
    %c0_24 = arith.constant 0 : index
    %24 = vector.load %arg4[%c2, %c0_23, %c0_24] : memref<3x12x128xbf16, #tpu.memory_space<vmem>>, vector<1x12x128xbf16>
    %25 = vector.shape_cast %24 : vector<1x12x128xbf16> to vector<12x128xbf16>
    %cst_25 = arith.constant dense<0.000000e+00> : vector<16x16x128xf32>
    %26 = tpu.matmul %23, %25, %cst_25 {dimension_numbers = #tpu.dot_dimension_numbers<[2], [0], [0, 1], [1], [0, 0, 0, 1, 1, 1], [], []>} : vector<16x16x12xbf16>, vector<12x128xbf16>, vector<16x16x128xf32> -> vector<16x16x128xf32>
    %c0_26 = arith.constant 0 : index
    %c0_27 = arith.constant 0 : index
    %c0_28 = arith.constant 0 : index
    %27 = vector.load %arg7[%c0_26, %c0_27, %c0_28] : memref<16x16x128xf32, #tpu.memory_space<vmem>>, vector<16x16x128xf32>
    %28 = arith.addf %27, %26 : vector<16x16x128xf32>
    %c0_29 = arith.constant 0 : index
    %c0_30 = arith.constant 0 : index
    %c0_31 = arith.constant 0 : index
    %29 = vector.load %arg7[%c0_29, %c0_30, %c0_31] : memref<16x16x128xf32, #tpu.memory_space<vmem>>, vector<16x16x128xf32>
    tpu.vector_store %arg7[%c0_29, %c0_30, %c0_31], %28 {strides = array<i32>} : memref<16x16x128xf32, #tpu.memory_space<vmem>>, vector<16x16x128xf32>,
    %c0_32 = arith.constant 0 : index
    %c0_33 = arith.constant 0 : index
    %c0_34 = arith.constant 0 : index
    %30 = vector.load %arg7[%c0_32, %c0_33, %c0_34] : memref<16x16x128xf32, #tpu.memory_space<vmem>>, vector<16x16x128xf32>
    %31 = vector.shape_cast %30 : vector<16x16x128xf32> to vector<1x16x16x128xf32>
    %32 = arith.truncf %31 : vector<1x16x16x128xf32> to vector<1x16x16x128xbf16>
    %c0_35 = arith.constant 0 : index
    %c0_36 = arith.constant 0 : index
    %c0_37 = arith.constant 0 : index
    %c0_38 = arith.constant 0 : index
    %33 = vector.load %arg5[%c0_35, %c0_36, %c0_37, %c0_38] : memref<1x16x16x128xbf16, #tpu.memory_space<vmem>>, vector<1x16x16x128xbf16>
    tpu.vector_store %arg5[%c0_35, %c0_36, %c0_37, %c0_38], %32 {strides = array<i32>} : memref<1x16x16x128xbf16, #tpu.memory_space<vmem>>, vector<1x16x16x128xbf16>,
    %34 = vector.shape_cast %30 : vector<16x16x128xf32> to vector<256x128xf32>
    %cst_39 = arith.constant dense<0.000000e+00> : vector<128xf32>
    %35 = vector.multi_reduction <add>, %34, %cst_39 [0] : vector<256x128xf32> to vector<128xf32>
    %36 = vector.shape_cast %35 : vector<128xf32> to vector<1x128xf32>
    %37 = arith.mulf %34, %34 : vector<256x128xf32>
    %cst_40 = arith.constant dense<0.000000e+00> : vector<128xf32>
    %38 = vector.multi_reduction <add>, %37, %cst_40 [0] : vector<256x128xf32> to vector<128xf32>
    %39 = vector.shape_cast %38 : vector<128xf32> to vector<1x128xf32>
    %40 = tpu.concatenate %36, %39 in 0 : vector<1x128xf32>, vector<1x128xf32> -> vector<2x128xf32>
    %41 = vector.shape_cast %40 : vector<2x128xf32> to vector<1x1x2x128xf32>
    %c0_41 = arith.constant 0 : index
    %c0_42 = arith.constant 0 : index
    %c0_43 = arith.constant 0 : index
    %c0_44 = arith.constant 0 : index
    %42 = vector.load %arg6[%c0_41, %c0_42, %c0_43, %c0_44] : memref<1x1x2x128xf32, #tpu.memory_space<vmem>>, vector<1x1x2x128xf32>
    tpu.vector_store %arg6[%c0_41, %c0_42, %c0_43, %c0_44], %41 {strides = array<i32>} : memref<1x1x2x128xf32, #tpu.memory_space<vmem>>, vector<1x1x2x128xf32>,
    return
  }
  func.func @transform_0(%arg0: i32, %arg1: i32, %arg2: i32) -> (i32, i32, i32, i32) {
    %c0_i32 = arith.constant 0 : i32
    %c0_i32_0 = arith.constant 0 : i32
    %c0_i32_1 = arith.constant 0 : i32
    %c0_i32_2 = arith.constant 0 : i32
    return %arg0, %c0_i32, %c0_i32_0, %c0_i32_1 : i32, i32, i32, i32
  }
  func.func @transform_1(%arg0: i32, %arg1: i32, %arg2: i32) -> (i32, i32, i32) {
    %c0_i32 = arith.constant 0 : i32
    %c0_i32_0 = arith.constant 0 : i32
    %c0_i32_1 = arith.constant 0 : i32
    return %c0_i32, %c0_i32_0, %arg1 : i32, i32, i32
  }
  func.func @transform_2(%arg0: i32, %arg1: i32, %arg2: i32) -> (i32, i32, i32, i32) {
    %c0_i32 = arith.constant 0 : i32
    %c0_i32_0 = arith.constant 0 : i32
    return %arg0, %arg2, %c0_i32, %arg1 : i32, i32, i32, i32
  }
  func.func @transform_3(%arg0: i32, %arg1: i32, %arg2: i32) -> (i32, i32, i32, i32) {
    %c0_i32 = arith.constant 0 : i32
    %c0_i32_0 = arith.constant 0 : i32
    return %arg0, %arg2, %c0_i32, %arg1 : i32, i32, i32, i32
  }
}

module attributes {stable_mosaic.version = 11 : i64} {
  func.func @_bn_relu_kernel(%arg0: i32, %arg1: i32, %arg2: memref<512x128xbf16, #tpu.memory_space<vmem>>, %arg3: memref<1x128xf32, #tpu.memory_space<vmem>>, %arg4: memref<1x128xf32, #tpu.memory_space<vmem>>, %arg5: memref<512x128xf32, #tpu.memory_space<vmem>>) attributes {dimension_semantics = [#tpu.dimension_semantics<parallel>, #tpu.dimension_semantics<parallel>], iteration_bounds = array<i64: 1, 1>, scalar_prefetch = 0 : i64, scratch_operands = 0 : i64, tpu.core_type = #tpu.core_type<tc>, window_params = [{transform_indices = @transform_0, window_bounds = array<i64: 512, 128>}, {transform_indices = @transform_1, window_bounds = array<i64: 1, 128>}, {transform_indices = @transform_2, window_bounds = array<i64: 1, 128>}, {transform_indices = @transform_3, window_bounds = array<i64: 512, 128>}]} {
    %c0 = arith.constant 0 : index
    %c0_0 = arith.constant 0 : index
    %0 = vector.load %arg2[%c0, %c0_0] : memref<512x128xbf16, #tpu.memory_space<vmem>>, vector<512x128xbf16>
    %1 = arith.extf %0 : vector<512x128xbf16> to vector<512x128xf32>
    %c0_1 = arith.constant 0 : index
    %c0_2 = arith.constant 0 : index
    %2 = vector.load %arg3[%c0_1, %c0_2] : memref<1x128xf32, #tpu.memory_space<vmem>>, vector<1x128xf32>
    %3 = vector.broadcast %2 : vector<1x128xf32> to vector<512x128xf32>
    %4 = arith.mulf %1, %3 : vector<512x128xf32>
    %c0_3 = arith.constant 0 : index
    %c0_4 = arith.constant 0 : index
    %5 = vector.load %arg4[%c0_3, %c0_4] : memref<1x128xf32, #tpu.memory_space<vmem>>, vector<1x128xf32>
    %6 = vector.broadcast %5 : vector<1x128xf32> to vector<512x128xf32>
    %7 = arith.addf %4, %6 : vector<512x128xf32>
    %cst = arith.constant 0.000000e+00 : f32
    %8 = vector.broadcast %cst : f32 to vector<512x128xf32>
    %9 = arith.maximumf %7, %8 : vector<512x128xf32>
    %c0_5 = arith.constant 0 : index
    %c0_6 = arith.constant 0 : index
    %10 = vector.load %arg5[%c0_5, %c0_6] : memref<512x128xf32, #tpu.memory_space<vmem>>, vector<512x128xf32>
    tpu.vector_store %arg5[%c0_5, %c0_6], %9 {strides = array<i32>} : memref<512x128xf32, #tpu.memory_space<vmem>>, vector<512x128xf32>,
    return
  }
  func.func @transform_0(%arg0: i32, %arg1: i32) -> (i32, i32) {
    %c0_i32 = arith.constant 0 : i32
    return %arg1, %arg0 : i32, i32
  }
  func.func @transform_1(%arg0: i32, %arg1: i32) -> (i32, i32) {
    %c0_i32 = arith.constant 0 : i32
    %c0_i32_0 = arith.constant 0 : i32
    return %c0_i32, %arg0 : i32, i32
  }
  func.func @transform_2(%arg0: i32, %arg1: i32) -> (i32, i32) {
    %c0_i32 = arith.constant 0 : i32
    %c0_i32_0 = arith.constant 0 : i32
    return %c0_i32, %arg0 : i32, i32
  }
  func.func @transform_3(%arg0: i32, %arg1: i32) -> (i32, i32) {
    %c0_i32 = arith.constant 0 : i32
    return %arg1, %arg0 : i32, i32
  }
}

</mosaic_0001>

<llo_original>
// kernel: basic_conv2d.3
$region0: #{basic_conv2d.3}
  #allocation0 [shape = 'u32[]', space=smem, size = 0x4, offset = 0x4, fixed_abs, tag = 'smem constant byte address 0x4 - core index']
  #allocation1 [shape = 'u32[144,128]{1,0:T(1,128)}', space=vmem, size = 0x12000, scoped, tag = 'internal scratch']
  %s0 = inlined_call_operand.vmem [shape: bf16[512,128], index: 0, kind: input, shape index: {}]
  %s1 = inlined_call_operand.vmem [shape: f32[1,128], index: 1, kind: input, shape index: {}]
  %s2 = inlined_call_operand.vmem [shape: f32[1,128], index: 2, kind: input, shape index: {}]
  %s3 = inlined_call_operand.vmem [shape: f32[512,128], index: 3, kind: output, shape index: {}]
  %s4 = sld [smem:[#allocation0]]
  $region22: #{basic_conv2d.3} parent=0
    _
  %s6 = ssub.s32 1, %s4
  %s7 = scalar_select 0, %s6, %s4
  // Predicated region
  $region2: #{basic_conv2d.3} parent=0 // pred_check
    _
  $region3: #{basic_conv2d.3} parent=0 // pred_check_branch
    %9 = sbr.rel (0) target = $region5
  $region4: #{basic_conv2d.3} parent=0 // pred_region
    _
  $region5: #{basic_conv2d.3} parent=0 // pred_fallthru
    _
  // Predicated region
  $region6: #{basic_conv2d.3} parent=0 // pred_check
    _
  $region7: #{basic_conv2d.3} parent=0 // pred_check_branch
    %11 = sbr.rel (0) target = $region9
  $region8: #{basic_conv2d.3} parent=0 // pred_region
    _
  $region9: #{basic_conv2d.3} parent=0 // pred_fallthru
    _
  // Predicated region
  $region10: #{basic_conv2d.3} parent=0 // pred_check
    _
  $region11: #{basic_conv2d.3} parent=0 // pred_check_branch
    %13 = sbr.rel (0) target = $region13
  $region12: #{basic_conv2d.3} parent=0 // pred_region
    _
  $region13: #{basic_conv2d.3} parent=0 // pred_fallthru
    _
  %v14 = vld [vmem:[%s0] sm:$0xf]
  %v15 = vld [vmem:[%s0 + $0x4] sm:$0xf]
  %v16 = vld [vmem:[%s0 + $0x8] sm:$0xf]
  %v17 = vld [vmem:[%s0 + $0xc] sm:$0xf]
  %v18 = vld [vmem:[%s0 + $0x10] sm:$0xf]
  %v19 = vld [vmem:[%s0 + $0x14] sm:$0xf]
  %v20 = vld [vmem:[%s0 + $0x18] sm:$0xf]
  %v21 = vld [vmem:[%s0 + $0x1c] sm:$0xf]
  %v22 = vld [vmem:[%s0 + $0x20] sm:$0xf]
  %v23 = vld [vmem:[%s0 + $0x24] sm:$0xf]
  %v24 = vld [vmem:[%s0 + $0x28] sm:$0xf]
  %v25 = vld [vmem:[%s0 + $0x2c] sm:$0xf]
  %v26 = vld [vmem:[%s0 + $0x30] sm:$0xf]
  %v27 = vld [vmem:[%s0 + $0x34] sm:$0xf]
  %v28 = vld [vmem:[%s0 + $0x38] sm:$0xf]
  %v29 = vld [vmem:[%s0 + $0x3c] sm:$0xf]
  %v30 = vld [vmem:[%s0 + $0x40] sm:$0xf]
  %v31 = vld [vmem:[%s0 + $0x44] sm:$0xf]
  %v32 = vld [vmem:[%s0 + $0x48] sm:$0xf]
  %v33 = vld [vmem:[%s0 + $0x4c] sm:$0xf]
  %v34 = vld [vmem:[%s0 + $0x50] sm:$0xf]
  %v35 = vld [vmem:[%s0 + $0x54] sm:$0xf]
  %v36 = vld [vmem:[%s0 + $0x58] sm:$0xf]
  %v37 = vld [vmem:[%s0 + $0x5c] sm:$0xf]
  %v38 = vld [vmem:[%s0 + $0x60] sm:$0xf]
  %v39 = vld [vmem:[%s0 + $0x64] sm:$0xf]
  %v40 = vld [vmem:[%s0 + $0x68] sm:$0xf]
  %v41 = vld [vmem:[%s0 + $0x6c] sm:$0xf]
  %v42 = vld [vmem:[%s0 + $0x70] sm:$0xf]
  %v43 = vld [vmem:[%s0 + $0x74] sm:$0xf]
  %v44 = vld [vmem:[%s0 + $0x78] sm:$0xf]
  %v45 = vld [vmem:[%s0 + $0x7c] sm:$0xf]
  %v46 = vld [vmem:[%s0 + $0x80] sm:$0xf]
  %v47 = vld [vmem:[%s0 + $0x84] sm:$0xf]
  %v48 = vld [vmem:[%s0 + $0x88] sm:$0xf]
  %v49 = vld [vmem:[%s0 + $0x8c] sm:$0xf]
  %v50 = vld [vmem:[%s0 + $0x90] sm:$0xf]
  %v51 = vld [vmem:[%s0 + $0x94] sm:$0xf]
  %v52 = vld [vmem:[%s0 + $0x98] sm:$0xf]
  %v53 = vld [vmem:[%s0 + $0x9c] sm:$0xf]
  %v54 = vld [vmem:[%s0 + $0xa0] sm:$0xf]
  %v55 = vld [vmem:[%s0 + $0xa4] sm:$0xf]
  %v56 = vld [vmem:[%s0 + $0xa8] sm:$0xf]
  %v57 = vld [vmem:[%s0 + $0xac] sm:$0xf]
  %v58 = vld [vmem:[%s0 + $0xb0] sm:$0xf]
  %v59 = vld [vmem:[%s0 + $0xb4] sm:$0xf]
  %v60 = vld [vmem:[%s0 + $0xb8] sm:$0xf]
  %v61 = vld [vmem:[%s0 + $0xbc] sm:$0xf]
  %v62 = vld [vmem:[%s0 + $0xc0] sm:$0xf]
  %v63 = vld [vmem:[%s0 + $0xc4] sm:$0xf]
  %v64 = vld [vmem:[%s0 + $0xc8] sm:$0xf]
  %v65 = vld [vmem:[%s0 + $0xcc] sm:$0xf]
  %v66 = vld [vmem:[%s0 + $0xd0] sm:$0xf]
  %v67 = vld [vmem:[%s0 + $0xd4] sm:$0xf]
  %v68 = vld [vmem:[%s0 + $0xd8] sm:$0xf]
  %v69 = vld [vmem:[%s0 + $0xdc] sm:$0xf]
  %v70 = vld [vmem:[%s0 + $0xe0] sm:$0xf]
  %v71 = vld [vmem:[%s0 + $0xe4] sm:$0xf]
  %v72 = vld [vmem:[%s0 + $0xe8] sm:$0xf]
  %v73 = vld [vmem:[%s0 + $0xec] sm:$0xf]
  %v74 = vld [vmem:[%s0 + $0xf0] sm:$0xf]
  %v75 = vld [vmem:[%s0 + $0xf4] sm:$0xf]
  %v76 = vld [vmem:[%s0 + $0xf8] sm:$0xf]
  %v77 = vld [vmem:[%s0 + $0xfc] sm:$0xf]
  %v78 = vunpack.c.l.bf16 %v14
  %v79 = vunpack.c.l.bf16 %v15
  %v80 = vunpack.c.l.bf16 %v16
  %v81 = vunpack.c.l.bf16 %v17
  %v82 = vunpack.c.l.bf16 %v18
  %v83 = vunpack.c.l.bf16 %v19
  %v84 = vunpack.c.l.bf16 %v20
  %v85 = vunpack.c.l.bf16 %v21
  %v86 = vunpack.c.l.bf16 %v22
  %v87 = vunpack.c.l.bf16 %v23
  %v88 = vunpack.c.l.bf16 %v24
  %v89 = vunpack.c.l.bf16 %v25
  %v90 = vunpack.c.l.bf16 %v26
  %v91 = vunpack.c.l.bf16 %v27
  %v92 = vunpack.c.l.bf16 %v28
  %v93 = vunpack.c.l.bf16 %v29
  %v94 = vunpack.c.l.bf16 %v30
  %v95 = vunpack.c.l.bf16 %v31
  %v96 = vunpack.c.l.bf16 %v32
  %v97 = vunpack.c.l.bf16 %v33
  %v98 = vunpack.c.l.bf16 %v34
  %v99 = vunpack.c.l.bf16 %v35
  %v100 = vunpack.c.l.bf16 %v36
  %v101 = vunpack.c.l.bf16 %v37
  %v102 = vunpack.c.l.bf16 %v38
  %v103 = vunpack.c.l.bf16 %v39
  %v104 = vunpack.c.l.bf16 %v40
  %v105 = vunpack.c.l.bf16 %v41
  %v106 = vunpack.c.l.bf16 %v42
  %v107 = vunpack.c.l.bf16 %v43
  %v108 = vunpack.c.l.bf16 %v44
  %v109 = vunpack.c.l.bf16 %v45
  %v110 = vunpack.c.l.bf16 %v46
  %v111 = vunpack.c.l.bf16 %v47
  %v112 = vunpack.c.l.bf16 %v48
  %v113 = vunpack.c.l.bf16 %v49
  %v114 = vunpack.c.l.bf16 %v50
  %v115 = vunpack.c.l.bf16 %v51
  %v116 = vunpack.c.l.bf16 %v52
  %v117 = vunpack.c.l.bf16 %v53
  %v118 = vunpack.c.l.bf16 %v54
  %v119 = vunpack.c.l.bf16 %v55
  %v120 = vunpack.c.l.bf16 %v56
  %v121 = vunpack.c.l.bf16 %v57
  %v122 = vunpack.c.l.bf16 %v58
  %v123 = vunpack.c.l.bf16 %v59
  %v124 = vunpack.c.l.bf16 %v60
  %v125 = vunpack.c.l.bf16 %v61
  %v126 = vunpack.c.l.bf16 %v62
  %v127 = vunpack.c.l.bf16 %v63
  %v128 = vunpack.c.l.bf16 %v64
  %v129 = vunpack.c.l.bf16 %v65
  %v130 = vunpack.c.l.bf16 %v66
  %v131 = vunpack.c.l.bf16 %v67
  %v132 = vunpack.c.l.bf16 %v68
  %v133 = vunpack.c.l.bf16 %v69
  %v134 = vunpack.c.l.bf16 %v70
  %v135 = vunpack.c.l.bf16 %v71
  %v136 = vunpack.c.l.bf16 %v72
  %v137 = vunpack.c.l.bf16 %v73
  %v138 = vunpack.c.l.bf16 %v74
  %v139 = vunpack.c.l.bf16 %v75
  %v140 = vunpack.c.l.bf16 %v76
  %v141 = vunpack.c.l.bf16 %v77
  %v142 = vld [vmem:[%s1] sm:$0x1]
  %v144 = vlaneseq
  %v145 = vshrl.u32 %v144, 7
  %v146 = vsub.s32 0, %v145
  %v147 = vrot.slane %v142, %v146
  %v149 = vmul.f32 %v78, %v147
  %v150 = vmul.f32 %v79, %v147
  %v151 = vmul.f32 %v80, %v147
  %v152 = vmul.f32 %v81, %v147
  %v153 = vmul.f32 %v82, %v147
  %v154 = vmul.f32 %v83, %v147
  %v155 = vmul.f32 %v84, %v147
  %v156 = vmul.f32 %v85, %v147
  %v157 = vmul.f32 %v86, %v147
  %v158 = vmul.f32 %v87, %v147
  %v159 = vmul.f32 %v88, %v147
  %v160 = vmul.f32 %v89, %v147
  %v161 = vmul.f32 %v90, %v147
  %v162 = vmul.f32 %v91, %v147
  %v163 = vmul.f32 %v92, %v147
  %v164 = vmul.f32 %v93, %v147
  %v165 = vmul.f32 %v94, %v147
  %v166 = vmul.f32 %v95, %v147
  %v167 = vmul.f32 %v96, %v147
  %v168 = vmul.f32 %v97, %v147
  %v169 = vmul.f32 %v98, %v147
  %v170 = vmul.f32 %v99, %v147
  %v171 = vmul.f32 %v100, %v147
  %v172 = vmul.f32 %v101, %v147
  %v173 = vmul.f32 %v102, %v147
  %v174 = vmul.f32 %v103, %v147
  %v175 = vmul.f32 %v104, %v147
  %v176 = vmul.f32 %v105, %v147
  %v177 = vmul.f32 %v106, %v147
  %v178 = vmul.f32 %v107, %v147
  %v179 = vmul.f32 %v108, %v147
  %v180 = vmul.f32 %v109, %v147
  %v181 = vmul.f32 %v110, %v147
  %v182 = vmul.f32 %v111, %v147
  %v183 = vmul.f32 %v112, %v147
  %v184 = vmul.f32 %v113, %v147
  %v185 = vmul.f32 %v114, %v147
  %v186 = vmul.f32 %v115, %v147
  %v187 = vmul.f32 %v116, %v147
  %v188 = vmul.f32 %v117, %v147
  %v189 = vmul.f32 %v118, %v147
  %v190 = vmul.f32 %v119, %v147
  %v191 = vmul.f32 %v120, %v147
  %v192 = vmul.f32 %v121, %v147
  %v193 = vmul.f32 %v122, %v147
  %v194 = vmul.f32 %v123, %v147
  %v195 = vmul.f32 %v124, %v147
  %v196 = vmul.f32 %v125, %v147
  %v197 = vmul.f32 %v126, %v147
  %v198 = vmul.f32 %v127, %v147
  %v199 = vmul.f32 %v128, %v147
  %v200 = vmul.f32 %v129, %v147
  %v201 = vmul.f32 %v130, %v147
  %v202 = vmul.f32 %v131, %v147
  %v203 = vmul.f32 %v132, %v147
  %v204 = vmul.f32 %v133, %v147
  %v205 = vmul.f32 %v134, %v147
  %v206 = vmul.f32 %v135, %v147
  %v207 = vmul.f32 %v136, %v147
  %v208 = vmul.f32 %v137, %v147
  %v209 = vmul.f32 %v138, %v147
  %v210 = vmul.f32 %v139, %v147
  %v211 = vmul.f32 %v140, %v147
  %v212 = vmul.f32 %v141, %v147
  %v213 = vld [vmem:[%s2] sm:$0x1]
  %v215 = vlaneseq
  %v216 = vshrl.u32 %v215, 7
  %v217 = vsub.s32 0, %v216
  %v218 = vrot.slane %v213, %v217
  %v220 = vadd.f32 %v149, %v218
  %v221 = vadd.f32 %v150, %v218
  %v222 = vadd.f32 %v151, %v218
  %v223 = vadd.f32 %v152, %v218
  %v224 = vadd.f32 %v153, %v218
  %v225 = vadd.f32 %v154, %v218
  %v226 = vadd.f32 %v155, %v218
  %v227 = vadd.f32 %v156, %v218
  %v228 = vadd.f32 %v157, %v218
  %v229 = vadd.f32 %v158, %v218
  %v230 = vadd.f32 %v159, %v218
  %v231 = vadd.f32 %v160, %v218
  %v232 = vadd.f32 %v161, %v218
  %v233 = vadd.f32 %v162, %v218
  %v234 = vadd.f32 %v163, %v218
  %v235 = vadd.f32 %v164, %v218
  %v236 = vadd.f32 %v165, %v218
  %v237 = vadd.f32 %v166, %v218
  %v238 = vadd.f32 %v167, %v218
  %v239 = vadd.f32 %v168, %v218
  %v240 = vadd.f32 %v169, %v218
  %v241 = vadd.f32 %v170, %v218
  %v242 = vadd.f32 %v171, %v218
  %v243 = vadd.f32 %v172, %v218
  %v244 = vadd.f32 %v173, %v218
  %v245 = vadd.f32 %v174, %v218
  %v246 = vadd.f32 %v175, %v218
  %v247 = vadd.f32 %v176, %v218
  %v248 = vadd.f32 %v177, %v218
  %v249 = vadd.f32 %v178, %v218
  %v250 = vadd.f32 %v179, %v218
  %v251 = vadd.f32 %v180, %v218
  %v252 = vadd.f32 %v181, %v218
  %v253 = vadd.f32 %v182, %v218
  %v254 = vadd.f32 %v183, %v218
  %v255 = vadd.f32 %v184, %v218
  %v256 = vadd.f32 %v185, %v218
  %v257 = vadd.f32 %v186, %v218
  %v258 = vadd.f32 %v187, %v218
  %v259 = vadd.f32 %v188, %v218
  %v260 = vadd.f32 %v189, %v218
  %v261 = vadd.f32 %v190, %v218
  %v262 = vadd.f32 %v191, %v218
  %v263 = vadd.f32 %v192, %v218
  %v264 = vadd.f32 %v193, %v218
  %v265 = vadd.f32 %v194, %v218
  %v266 = vadd.f32 %v195, %v218
  %v267 = vadd.f32 %v196, %v218
  %v268 = vadd.f32 %v197, %v218
  %v269 = vadd.f32 %v198, %v218
  %v270 = vadd.f32 %v199, %v218
  %v271 = vadd.f32 %v200, %v218
  %v272 = vadd.f32 %v201, %v218
  %v273 = vadd.f32 %v202, %v218
  %v274 = vadd.f32 %v203, %v218
  %v275 = vadd.f32 %v204, %v218
  %v276 = vadd.f32 %v205, %v218
  %v277 = vadd.f32 %v206, %v218
  %v278 = vadd.f32 %v207, %v218
  %v279 = vadd.f32 %v208, %v218
  %v280 = vadd.f32 %v209, %v218
  %v281 = vadd.f32 %v210, %v218
  %v282 = vadd.f32 %v211, %v218
  %v283 = vadd.f32 %v212, %v218
  %v284 = vmax.f32 %v220, 0.0
  %v285 = vmax.f32 %v221, 0.0
  %v286 = vmax.f32 %v222, 0.0
  %v287 = vmax.f32 %v223, 0.0
  %v288 = vmax.f32 %v224, 0.0
  %v289 = vmax.f32 %v225, 0.0
  %v290 = vmax.f32 %v226, 0.0
  %v291 = vmax.f32 %v227, 0.0
  %v292 = vmax.f32 %v228, 0.0
  %v293 = vmax.f32 %v229, 0.0
  %v294 = vmax.f32 %v230, 0.0
  %v295 = vmax.f32 %v231, 0.0
  %v296 = vmax.f32 %v232, 0.0
  %v297 = vmax.f32 %v233, 0.0
  %v298 = vmax.f32 %v234, 0.0
  %v299 = vmax.f32 %v235, 0.0
  %v300 = vmax.f32 %v236, 0.0
  %v301 = vmax.f32 %v237, 0.0
  %v302 = vmax.f32 %v238, 0.0
  %v303 = vmax.f32 %v239, 0.0
  %v304 = vmax.f32 %v240, 0.0
  %v305 = vmax.f32 %v241, 0.0
  %v306 = vmax.f32 %v242, 0.0
  %v307 = vmax.f32 %v243, 0.0
  %v308 = vmax.f32 %v244, 0.0
  %v309 = vmax.f32 %v245, 0.0
  %v310 = vmax.f32 %v246, 0.0
  %v311 = vmax.f32 %v247, 0.0
  %v312 = vmax.f32 %v248, 0.0
  %v313 = vmax.f32 %v249, 0.0
  %v314 = vmax.f32 %v250, 0.0
  %v315 = vmax.f32 %v251, 0.0
  %v316 = vmax.f32 %v252, 0.0
  %v317 = vmax.f32 %v253, 0.0
  %v318 = vmax.f32 %v254, 0.0
  %v319 = vmax.f32 %v255, 0.0
  %v320 = vmax.f32 %v256, 0.0
  %v321 = vmax.f32 %v257, 0.0
  %v322 = vmax.f32 %v258, 0.0
  %v323 = vmax.f32 %v259, 0.0
  %v324 = vmax.f32 %v260, 0.0
  %v325 = vmax.f32 %v261, 0.0
  %v326 = vmax.f32 %v262, 0.0
  %v327 = vmax.f32 %v263, 0.0
  %v328 = vmax.f32 %v264, 0.0
  %v329 = vmax.f32 %v265, 0.0
  %v330 = vmax.f32 %v266, 0.0
  %v331 = vmax.f32 %v267, 0.0
  %v332 = vmax.f32 %v268, 0.0
  %v333 = vmax.f32 %v269, 0.0
  %v334 = vmax.f32 %v270, 0.0
  %v335 = vmax.f32 %v271, 0.0
  %v336 = vmax.f32 %v272, 0.0
  %v337 = vmax.f32 %v273, 0.0
  %v338 = vmax.f32 %v274, 0.0
  %v339 = vmax.f32 %v275, 0.0
  %v340 = vmax.f32 %v276, 0.0
  %v341 = vmax.f32 %v277, 0.0
  %v342 = vmax.f32 %v278, 0.0
  %v343 = vmax.f32 %v279, 0.0
  %v344 = vmax.f32 %v280, 0.0
  %v345 = vmax.f32 %v281, 0.0
  %v346 = vmax.f32 %v282, 0.0
  %v347 = vmax.f32 %v283, 0.0
  %348 = vst [vmem:[%s3] sm:$0xff] %v284
  %349 = vst [vmem:[%s3 + $0x8] sm:$0xff] %v285
  %350 = vst [vmem:[%s3 + $0x10] sm:$0xff] %v286
  %351 = vst [vmem:[%s3 + $0x18] sm:$0xff] %v287
  %352 = vst [vmem:[%s3 + $0x20] sm:$0xff] %v288
  %353 = vst [vmem:[%s3 + $0x28] sm:$0xff] %v289
  %354 = vst [vmem:[%s3 + $0x30] sm:$0xff] %v290
  %355 = vst [vmem:[%s3 + $0x38] sm:$0xff] %v291
  %356 = vst [vmem:[%s3 + $0x40] sm:$0xff] %v292
  %357 = vst [vmem:[%s3 + $0x48] sm:$0xff] %v293
  %358 = vst [vmem:[%s3 + $0x50] sm:$0xff] %v294
  %359 = vst [vmem:[%s3 + $0x58] sm:$0xff] %v295
  %360 = vst [vmem:[%s3 + $0x60] sm:$0xff] %v296
  %361 = vst [vmem:[%s3 + $0x68] sm:$0xff] %v297
  %362 = vst [vmem:[%s3 + $0x70] sm:$0xff] %v298
  %363 = vst [vmem:[%s3 + $0x78] sm:$0xff] %v299
  %364 = vst [vmem:[%s3 + $0x80] sm:$0xff] %v300
  %365 = vst [vmem:[%s3 + $0x88] sm:$0xff] %v301
  %366 = vst [vmem:[%s3 + $0x90] sm:$0xff] %v302
  %367 = vst [vmem:[%s3 + $0x98] sm:$0xff] %v303
  %368 = vst [vmem:[%s3 + $0xa0] sm:$0xff] %v304
  %369 = vst [vmem:[%s3 + $0xa8] sm:$0xff] %v305
  %370 = vst [vmem:[%s3 + $0xb0] sm:$0xff] %v306
  %371 = vst [vmem:[%s3 + $0xb8] sm:$0xff] %v307
  %372 = vst [vmem:[%s3 + $0xc0] sm:$0xff] %v308
  %373 = vst [vmem:[%s3 + $0xc8] sm:$0xff] %v309
  %374 = vst [vmem:[%s3 + $0xd0] sm:$0xff] %v310
  %375 = vst [vmem:[%s3 + $0xd8] sm:$0xff] %v311
  %376 = vst [vmem:[%s3 + $0xe0] sm:$0xff] %v312
  %377 = vst [vmem:[%s3 + $0xe8] sm:$0xff] %v313
  %378 = vst [vmem:[%s3 + $0xf0] sm:$0xff] %v314
  %379 = vst [vmem:[%s3 + $0xf8] sm:$0xff] %v315
  %380 = vst [vmem:[%s3 + $0x100] sm:$0xff] %v316
  %381 = vst [vmem:[%s3 + $0x108] sm:$0xff] %v317
  %382 = vst [vmem:[%s3 + $0x110] sm:$0xff] %v318
  %383 = vst [vmem:[%s3 + $0x118] sm:$0xff] %v319
  %384 = vst [vmem:[%s3 + $0x120] sm:$0xff] %v320
  %385 = vst [vmem:[%s3 + $0x128] sm:$0xff] %v321
  %386 = vst [vmem:[%s3 + $0x130] sm:$0xff] %v322
  %387 = vst [vmem:[%s3 + $0x138] sm:$0xff] %v323
  %388 = vst [vmem:[%s3 + $0x140] sm:$0xff] %v324
  %389 = vst [vmem:[%s3 + $0x148] sm:$0xff] %v325
  %390 = vst [vmem:[%s3 + $0x150] sm:$0xff] %v326
  %391 = vst [vmem:[%s3 + $0x158] sm:$0xff] %v327
  %392 = vst [vmem:[%s3 + $0x160] sm:$0xff] %v328
  %393 = vst [vmem:[%s3 + $0x168] sm:$0xff] %v329
  %394 = vst [vmem:[%s3 + $0x170] sm:$0xff] %v330
  %395 = vst [vmem:[%s3 + $0x178] sm:$0xff] %v331
  %396 = vst [vmem:[%s3 + $0x180] sm:$0xff] %v332
  %397 = vst [vmem:[%s3 + $0x188] sm:$0xff] %v333
  %398 = vst [vmem:[%s3 + $0x190] sm:$0xff] %v334
  %399 = vst [vmem:[%s3 + $0x198] sm:$0xff] %v335
  %400 = vst [vmem:[%s3 + $0x1a0] sm:$0xff] %v336
  %401 = vst [vmem:[%s3 + $0x1a8] sm:$0xff] %v337
  %402 = vst [vmem:[%s3 + $0x1b0] sm:$0xff] %v338
  %403 = vst [vmem:[%s3 + $0x1b8] sm:$0xff] %v339
  %404 = vst [vmem:[%s3 + $0x1c0] sm:$0xff] %v340
  %405 = vst [vmem:[%s3 + $0x1c8] sm:$0xff] %v341
  %406 = vst [vmem:[%s3 + $0x1d0] sm:$0xff] %v342
  %407 = vst [vmem:[%s3 + $0x1d8] sm:$0xff] %v343
  %408 = vst [vmem:[%s3 + $0x1e0] sm:$0xff] %v344
  %409 = vst [vmem:[%s3 + $0x1e8] sm:$0xff] %v345
  %410 = vst [vmem:[%s3 + $0x1f0] sm:$0xff] %v346
  %411 = vst [vmem:[%s3 + $0x1f8] sm:$0xff] %v347
  // Predicated region
  $region14: #{basic_conv2d.3} parent=0 // pred_check
    _
  $region15: #{basic_conv2d.3} parent=0 // pred_check_branch
    %413 = sbr.rel (0) target = $region17
  $region16: #{basic_conv2d.3} parent=0 // pred_region
    _
  $region17: #{basic_conv2d.3} parent=0 // pred_fallthru
    _
  // Predicated region
  $region18: #{basic_conv2d.3} parent=0 // pred_check
    _
  $region19: #{basic_conv2d.3} parent=0 // pred_check_branch
    %415 = sbr.rel (0) target = $region21
  $region20: #{basic_conv2d.3} parent=0 // pred_region
    _
  $region21: #{basic_conv2d.3} parent=0 // pred_fallthru
    _

// kernel: basic_conv2d.2
$region0: #{basic_conv2d.2}
  #allocation0 [shape = 'u32[]', space=smem, size = 0x4, offset = 0x4, fixed_abs, tag = 'smem constant byte address 0x4 - core index']
  #allocation1 [shape = 'u32[144,128]{1,0:T(1,128)}', space=vmem, size = 0x12000, scoped, tag = 'internal scratch']
  #allocation2 [shape = 'f32[16,16,128]{2,1,0:T(8,128)}', space=vmem, size = 0x20000, scoped, tag = 'scratch operand']
  %s0 = inlined_call_operand.vmem [shape: bf16[2,18,16,12], index: 0, kind: input, shape index: {}]
  %s1 = inlined_call_operand.vmem [shape: bf16[3,12,128], index: 1, kind: input, shape index: {}]
  %s2 = inlined_call_operand.vmem [shape: bf16[2,16,16,128], index: 2, kind: output, shape index: {0}]
  %s3 = inlined_call_operand.vmem [shape: f32[2,1,2,128], index: 3, kind: output, shape index: {1}]
  %4 = xla_tuple %s2, %s3
  %s5 = sld [smem:[#allocation0]]
  $region49: #{basic_conv2d.2} parent=0
    _
  %s7 = ssub.s32 1, %s5
  %s8 = scalar_select 0, %s7, %s5
  loop: start=0, step=1, limit=4
  $region2: #{basic_conv2d.2} parent=0 // loop_pre_header
    _
  $region3: #{basic_conv2d.2} parent=0 // loop_header
    %s10 = sphi 0, %s14
    %p11 = scmp.ge.s32.totalorder %s10, 4
    %s17 = sphi 0, %s36
    %s18 = sphi 0, %s32
    %s19 = sphi 0, %s28
    %s20 = sphi 0, %s17
    %s21 = sphi 0, %s18
    %s22 = sphi 0, %s19
    %s23 = sphi 0, %s20
    %s24 = sphi 0, %s21
    %s25 = sphi 0, %s22
    %s39 = sphi 0, %s41
    %s42 = sphi 0, %s39
    %s43 = sphi 0, %s42
    %s59 = sphi 0, %s43
    %s65 = sphi 0, %s67
    %s68 = sphi 0, %s65
    %s69 = sphi 0, %s68
    %s85 = sphi 0, %s69
    %s95 = sphi 0, %s97
    %s98 = sphi 0, %s95
    %s99 = sphi 0, %s98
    %s115 = sphi 0, %s99
    %s125 = sphi 0, %s127
    %s128 = sphi 0, %s125
    %s129 = sphi 0, %s128
    %s145 = sphi 0, %s129
  $region4: #{basic_conv2d.2} parent=0 // loop_header_branch
    %13 = sbr.rel (%p11) target = $region8
  $region5: #{basic_conv2d.2} parent=0 // loop_body
    %s15 = ssub.s32 %s10, 1
    %s16 = ssub.s32 %s10, 2
    %s26 = sadd.s32 1, %s19
    %p27 = scmp.ge.s32.totalorder %s26, 1
    %s28 = scalar_select %p27, 0, %s26
    %s29 = sadd.s32 1, %s18
    %s30 = scalar_select %p27, %s29, %s18
    %p31 = scmp.ge.s32.totalorder %s30, 1
    %s32 = scalar_select %p31, 0, %s30
    %s33 = sadd.s32 1, %s17
    %s34 = scalar_select %p31, %s33, %s17
    %p35 = scmp.ge.s32.totalorder %s34, 2
    %s36 = scalar_select %p35, 0, %s34
    %s37 = ssub.s32 %s17, %s36
    %p38 = scmp.eq.s32.totalorder %s37, 0
    %s40 = sadd.s32 %s39, 1
    %s41 = scalar_select %p38, %s39, %s40
    %p44 = pneg %p38
    %p45 = scmp.eq.s32.totalorder %s10, 1
    %p46 = por %p44, %p45
    %p47 = scmp.ne.s32.totalorder %s39, %s42
    %p48 = scmp.eq.s32.totalorder %s10, 0
    %p49 = por %p47, %p48
    %p50 = scmp.ne.s32.totalorder %s39, %s42
    %p51 = scmp.eq.s32.totalorder %s15, 1
    %p52 = por %p50, %p51
    %p53 = scmp.ne.s32.totalorder %s42, %s43
    %p54 = scmp.eq.s32.totalorder %s15, 0
    %p55 = por %p53, %p54
    %p56 = scmp.ne.s32.totalorder %s42, %s43
    %p57 = scmp.eq.s32.totalorder %s16, 1
    %p58 = por %p56, %p57
    %p60 = scmp.ne.s32.totalorder %s43, %s59
    %p61 = scmp.eq.s32.totalorder %s16, 0
    %p62 = por %p60, %p61
    %s63 = ssub.s32 %s18, %s32
    %p64 = scmp.eq.s32.totalorder %s63, 0
    %s66 = sadd.s32 %s65, 1
    %s67 = scalar_select %p64, %s65, %s66
    %p70 = pneg %p64
    %p71 = scmp.eq.s32.totalorder %s10, 1
    %p72 = por %p70, %p71
    %p73 = scmp.ne.s32.totalorder %s65, %s68
    %p74 = scmp.eq.s32.totalorder %s10, 0
    %p75 = por %p73, %p74
    %p76 = scmp.ne.s32.totalorder %s65, %s68
    %p77 = scmp.eq.s32.totalorder %s15, 1
    %p78 = por %p76, %p77
    %p79 = scmp.ne.s32.totalorder %s68, %s69
    %p80 = scmp.eq.s32.totalorder %s15, 0
    %p81 = por %p79, %p80
    %p82 = scmp.ne.s32.totalorder %s68, %s69
    %p83 = scmp.eq.s32.totalorder %s16, 1
    %p84 = por %p82, %p83
    %p86 = scmp.ne.s32.totalorder %s69, %s85
    %p87 = scmp.eq.s32.totalorder %s16, 0
    %p88 = por %p86, %p87
    %s89 = ssub.s32 %s17, %s36
    %s90 = ssub.s32 %s19, %s28
    %s91 = sor.u32 %s89, %s90
    %s92 = ssub.s32 %s18, %s32
    %s93 = sor.u32 %s91, %s92
    %p94 = scmp.eq.s32.totalorder %s93, 0
    %s96 = sadd.s32 %s95, 1
    %s97 = scalar_select %p94, %s95, %s96
    %p100 = pneg %p94
    %p101 = scmp.eq.s32.totalorder %s10, 1
    %p102 = por %p100, %p101
    %p103 = scmp.ne.s32.totalorder %s95, %s98
    %p104 = scmp.eq.s32.totalorder %s10, 0
    %p105 = por %p103, %p104
    %p106 = scmp.ne.s32.totalorder %s95, %s98
    %p107 = scmp.eq.s32.totalorder %s15, 1
    %p108 = por %p106, %p107
    %p109 = scmp.ne.s32.totalorder %s98, %s99
    %p110 = scmp.eq.s32.totalorder %s15, 0
    %p111 = por %p109, %p110
    %p112 = scmp.ne.s32.totalorder %s98, %s99
    %p113 = scmp.eq.s32.totalorder %s16, 1
    %p114 = por %p112, %p113
    %p116 = scmp.ne.s32.totalorder %s99, %s115
    %p117 = scmp.eq.s32.totalorder %s16, 0
    %p118 = por %p116, %p117
    %s119 = ssub.s32 %s17, %s36
    %s120 = ssub.s32 %s19, %s28
    %s121 = sor.u32 %s119, %s120
    %s122 = ssub.s32 %s18, %s32
    %s123 = sor.u32 %s121, %s122
    %p124 = scmp.eq.s32.totalorder %s123, 0
    %s126 = sadd.s32 %s125, 1
    %s127 = scalar_select %p124, %s125, %s126
    %p130 = pneg %p124
    %p131 = scmp.eq.s32.totalorder %s10, 1
    %p132 = por %p130, %p131
    %p133 = scmp.ne.s32.totalorder %s125, %s128
    %p134 = scmp.eq.s32.totalorder %s10, 0
    %p135 = por %p133, %p134
    %p136 = scmp.ne.s32.totalorder %s125, %s128
    %p137 = scmp.eq.s32.totalorder %s15, 1
    %p138 = por %p136, %p137
    %p139 = scmp.ne.s32.totalorder %s128, %s129
    %p140 = scmp.eq.s32.totalorder %s15, 0
    %p141 = por %p139, %p140
    %p142 = scmp.ne.s32.totalorder %s128, %s129
    %p143 = scmp.eq.s32.totalorder %s16, 1
    %p144 = por %p142, %p143
    %p146 = scmp.ne.s32.totalorder %s129, %s145
    %p147 = scmp.eq.s32.totalorder %s16, 0
    %p148 = por %p146, %p147
    %p149 = scmp.le.s32.totalorder 1, %s10
    %p150 = scmp.lt.s32.totalorder %s10, 3
    %p151 = pnand %p149, %p150
    %p152 = pneg %p151
    // Predicated region
    $region9: #{basic_conv2d.2} parent=5 // pred_check
      _
    $region10: #{basic_conv2d.2} parent=5 // pred_check_branch
      %154 = sbr.rel (%p151) target = $region12
    $region11: #{basic_conv2d.2} parent=5 // pred_region
      %s155 = ssub.s32 %s10, 1
      // Predicated region
      $region13: #{basic_conv2d.2} parent=11 // pred_check
        %p156 = pneg %p81
      $region14: #{basic_conv2d.2} parent=11 // pred_check_branch
        %158 = sbr.rel (%p156) target = $region16
      $region15: #{basic_conv2d.2} parent=11 // pred_region
        %p159 = scmp.lt.s32.totalorder %s21, 0
        %s160 = scalar_select %p159, %s21, 0
        %s161 = smul.addr %s160, 4
        %s162 = scalar_lea.vmem %s1, %s161
      $region16: #{basic_conv2d.2} parent=11 // pred_fallthru
        _
    $region12: #{basic_conv2d.2} parent=5 // pred_fallthru
      _
    %p163 = scmp.lt.s32.totalorder %s10, 2
    // Predicated region
    $region17: #{basic_conv2d.2} parent=5 // pred_check
      %p164 = pneg %p163
    $region18: #{basic_conv2d.2} parent=5 // pred_check_branch
      %166 = sbr.rel (%p164) target = $region20
    $region19: #{basic_conv2d.2} parent=5 // pred_region
      // Predicated region
      $region21: #{basic_conv2d.2} parent=19 // pred_check
        %p167 = pneg %p49
      $region22: #{basic_conv2d.2} parent=19 // pred_check_branch
        %169 = sbr.rel (%p167) target = $region24
      $region23: #{basic_conv2d.2} parent=19 // pred_region
        %p170 = scmp.lt.s32.totalorder %s17, 1
        %s171 = scalar_select %p170, %s17, 1
        %s172 = smul.addr %s171, 36
        %s173 = smul.addr %s172, 4
        %s174 = scalar_lea.vmem %s0, %s173
      $region24: #{basic_conv2d.2} parent=19 // pred_fallthru
        _
    $region20: #{basic_conv2d.2} parent=5 // pred_fallthru
      _
    %p175 = scmp.le.s32.totalorder 1, %s10
    %p176 = scmp.lt.s32.totalorder %s10, 3
    %p177 = pnand %p175, %p176
    %p178 = pneg %p177
    // Predicated region
    $region25: #{basic_conv2d.2} parent=5 // pred_check
      _
    $region26: #{basic_conv2d.2} parent=5 // pred_check_branch
      %180 = sbr.rel (%p177) target = $region28
    $region27: #{basic_conv2d.2} parent=5 // pred_region
      %s181 = ssub.s32 %s10, 1
      %p182 = scmp.lt.s32.totalorder %s20, 1
      %s183 = scalar_select %p182, %s20, 1
      %s184 = smul.addr %s183, 36
      %s185 = smul.addr %s184, 4
      %s186 = scalar_lea.vmem %s0, %s185
      %p187 = pneg %p55
      %p188 = pneg %p52
      %p189 = scmp.lt.s32.totalorder %s21, 0
      %s190 = scalar_select %p189, %s21, 0
      %s191 = smul.addr %s190, 4
      %s192 = scalar_lea.vmem %s1, %s191
      %p193 = pneg %p81
      %p194 = pneg %p78
      %p195 = pneg %p111
      %p196 = pneg %p108
      %s197 = smul.u32 16, %s22
      %p198 = scmp.lt.s32.totalorder %s20, 1
      %s199 = scalar_select %p198, %s20, 1
      %p200 = scmp.lt.s32.totalorder %s197, 15
      %s201 = scalar_select %p200, %s197, 15
      %p202 = scmp.lt.s32.totalorder %s21, 0
      %s203 = scalar_select %p202, %s21, 0
      %s204 = smul.addr %s201, 2
      %s205 = sadd.s32 %s203, %s204
      %s206 = smul.addr %s199, 32
      %s207 = sadd.s32 %s205, %s206
      %s208 = smul.addr %s207, 4
      %s209 = scalar_lea.vmem %s2, %s208
      %p210 = pneg %p141
      %p211 = pneg %p138
      %p212 = scmp.lt.s32.totalorder %s20, 1
      %s213 = scalar_select %p212, %s20, 1
      %p214 = scmp.lt.s32.totalorder %s22, 0
      %s215 = scalar_select %p214, %s22, 0
      %p216 = scmp.lt.s32.totalorder %s21, 0
      %s217 = scalar_select %p216, %s21, 0
      %s218 = sadd.s32 %s217, %s215
      %s219 = sadd.s32 %s218, %s213
      %s220 = smul.addr %s219, 2
      %s221 = scalar_lea.vmem %s3, %s220
      %p222 = scmp.lt.s32.totalorder %s20, 1
      %s223 = scalar_select %p222, %s20, 1
      %s224 = smul.addr %s223, 36
      %s225 = smul.addr %s224, 4
      %s226 = scalar_lea.vmem %s0, %s225
      %p227 = scmp.lt.s32.totalorder %s21, 0
      %s228 = scalar_select %p227, %s21, 0
      %s229 = smul.addr %s228, 4
      %s230 = scalar_lea.vmem %s1, %s229
      %s231 = smul.u32 16, %s22
      %p232 = scmp.lt.s32.totalorder %s20, 1
      %s233 = scalar_select %p232, %s20, 1
      %p234 = scmp.lt.s32.totalorder %s231, 15
      %s235 = scalar_select %p234, %s231, 15
      %p236 = scmp.lt.s32.totalorder %s21, 0
      %s237 = scalar_select %p236, %s21, 0
      %s238 = smul.addr %s235, 2
      %s239 = sadd.s32 %s237, %s238
      %s240 = smul.addr %s233, 32
      %s241 = sadd.s32 %s239, %s240
      %s242 = smul.addr %s241, 4
      %s243 = scalar_lea.vmem %s2, %s242
      %s244 = smul.u32 16, %s22
      %p245 = scmp.lt.s32.totalorder %s20, 1
      %s246 = scalar_select %p245, %s20, 1
      %p247 = scmp.lt.s32.totalorder %s22, 0
      %s248 = scalar_select %p247, %s22, 0
      %p249 = scmp.lt.s32.totalorder %s21, 0
      %s250 = scalar_select %p249, %s21, 0
      %s251 = sadd.s32 %s250, %s248
      %s252 = sadd.s32 %s251, %s246
      %s253 = smul.addr %s252, 2
      %s254 = scalar_lea.vmem %s3, %s253
      %s256 = smul.u32 %s22, 16
      %s257 = smul.u32 %s256, 2
      %s258 = smul.addr %s257, 4
      %s259 = scalar_lea.vmem %s226, %s258
      %v260 = vld [vmem:[%s259] sm:$0xf]
      %v261 = vld [vmem:[%s259 + $0x4] sm:$0xf]
      %v262 = vld [vmem:[%s259 + $0x8] sm:$0xf]
      %v263 = vld [vmem:[%s259 + $0xc] sm:$0xf]
      %v264 = vld [vmem:[%s259 + $0x10] sm:$0xf]
      %v265 = vld [vmem:[%s259 + $0x14] sm:$0xf]
      %v266 = vld [vmem:[%s259 + $0x18] sm:$0xf]
      %v267 = vld [vmem:[%s259 + $0x1c] sm:$0xf]
      %v268 = vld [vmem:[%s259 + $0x20] sm:$0xf]
      %v269 = vld [vmem:[%s259 + $0x24] sm:$0xf]
      %v270 = vld [vmem:[%s259 + $0x28] sm:$0xf]
      %v271 = vld [vmem:[%s259 + $0x2c] sm:$0xf]
      %v272 = vld [vmem:[%s259 + $0x30] sm:$0xf]
      %v273 = vld [vmem:[%s259 + $0x34] sm:$0xf]
      %v274 = vld [vmem:[%s259 + $0x38] sm:$0xf]
      %v275 = vld [vmem:[%s259 + $0x3c] sm:$0xf]
      %v276 = vld [vmem:[%s259 + $0x40] sm:$0xf]
      %v277 = vld [vmem:[%s259 + $0x44] sm:$0xf]
      %v278 = vld [vmem:[%s259 + $0x48] sm:$0xf]
      %v279 = vld [vmem:[%s259 + $0x4c] sm:$0xf]
      %v280 = vld [vmem:[%s259 + $0x50] sm:$0xf]
      %v281 = vld [vmem:[%s259 + $0x54] sm:$0xf]
      %v282 = vld [vmem:[%s259 + $0x58] sm:$0xf]
      %v283 = vld [vmem:[%s259 + $0x5c] sm:$0xf]
      %v284 = vld [vmem:[%s259 + $0x60] sm:$0xf]
      %v285 = vld [vmem:[%s259 + $0x64] sm:$0xf]
      %v286 = vld [vmem:[%s259 + $0x68] sm:$0xf]
      %v287 = vld [vmem:[%s259 + $0x6c] sm:$0xf]
      %v288 = vld [vmem:[%s259 + $0x70] sm:$0xf]
      %v289 = vld [vmem:[%s259 + $0x74] sm:$0xf]
      %v290 = vld [vmem:[%s259 + $0x78] sm:$0xf]
      %v291 = vld [vmem:[%s259 + $0x7c] sm:$0xf]
      %v292 = vld [vmem:[%s230] sm:$0xf]
      %v293 = vld [vmem:[%s230 + $0x4] sm:$0x3]
      %v326 = vunpack.c.l.b16 %v260
      %v327 = vunpack.c.l.b16 %v261
      %v328 = vunpack.c.l.b16 %v262
      %v329 = vunpack.c.l.b16 %v263
      %v330 = vunpack.c.l.b16 %v264
      %v331 = vunpack.c.l.b16 %v265
      %v332 = vunpack.c.l.b16 %v266
      %v333 = vunpack.c.l.b16 %v267
      %v334 = vunpack.c.l.b16 %v268
      %v335 = vunpack.c.l.b16 %v269
      %v336 = vunpack.c.l.b16 %v270
      %v337 = vunpack.c.l.b16 %v271
      %v338 = vunpack.c.l.b16 %v272
      %v339 = vunpack.c.l.b16 %v273
      %v340 = vunpack.c.l.b16 %v274
      %v341 = vunpack.c.l.b16 %v275
      %v342 = vunpack.c.l.b16 %v276
      %v343 = vunpack.c.l.b16 %v277
      %v344 = vunpack.c.l.b16 %v278
      %v345 = vunpack.c.l.b16 %v279
      %v346 = vunpack.c.l.b16 %v280
      %v347 = vunpack.c.l.b16 %v281
      %v348 = vunpack.c.l.b16 %v282
      %v349 = vunpack.c.l.b16 %v283
      %v350 = vunpack.c.l.b16 %v284
      %v351 = vunpack.c.l.b16 %v285
      %v352 = vunpack.c.l.b16 %v286
      %v353 = vunpack.c.l.b16 %v287
      %v354 = vunpack.c.l.b16 %v288
      %v355 = vunpack.c.l.b16 %v289
      %v356 = vunpack.c.l.b16 %v290
      %v357 = vunpack.c.l.b16 %v291
      %v358 = vpack.c.b16 %v327, %v326
      %v359 = vpack.c.b16 %v329, %v328
      %v360 = vpack.c.b16 %v331, %v330
      %v361 = vpack.c.b16 %v333, %v332
      %v362 = vpack.c.b16 %v335, %v334
      %v363 = vpack.c.b16 %v337, %v336
      %v364 = vpack.c.b16 %v339, %v338
      %v365 = vpack.c.b16 %v341, %v340
      %v366 = vpack.c.b16 %v343, %v342
      %v367 = vpack.c.b16 %v345, %v344
      %v368 = vpack.c.b16 %v347, %v346
      %v369 = vpack.c.b16 %v349, %v348
      %v370 = vpack.c.b16 %v351, %v350
      %v371 = vpack.c.b16 %v353, %v352
      %v372 = vpack.c.b16 %v355, %v354
      %v373 = vpack.c.b16 %v357, %v356
      %v376 = vunpack.c.l.b16 %v292
      %v377 = vunpack.c.l.b16 %v293
      %v378 = vpack.c.b16 %v377, %v376
      %vm379 = vcmask 97280
      %v381 = vsel %vm379, %v358, 0
      %v384 = vsel %vm379, %v359, 0
      %v387 = vsel %vm379, %v360, 0
      %v390 = vsel %vm379, %v361, 0
      %v393 = vsel %vm379, %v362, 0
      %v396 = vsel %vm379, %v363, 0
      %v399 = vsel %vm379, %v364, 0
      %v402 = vsel %vm379, %v365, 0
      %v405 = vsel %vm379, %v366, 0
      %v408 = vsel %vm379, %v367, 0
      %v411 = vsel %vm379, %v368, 0
      %v414 = vsel %vm379, %v369, 0
      %v417 = vsel %vm379, %v370, 0
      %v420 = vsel %vm379, %v371, 0
      %v423 = vsel %vm379, %v372, 0
      %v426 = vsel %vm379, %v373, 0
      %vm428 = vcmask 1045504
      %v430 = vsel %vm428, %v378, 0
      %432 = vmatprep.subr.bf16.mxu0 0
      %433 = vmatpush1.bf16.msra.mxu0 %v430
      %434 = vmatprep.subr.bf16.mxu0 0
      %435 = vmatpush1.bf16.msra.mxu0 0
      %436 = vmatprep.subr.bf16.mxu0 0
      %437 = vmatpush1.bf16.msra.mxu0 0
      %438 = vmatprep.subr.bf16.mxu0 0
      %439 = vmatpush1.bf16.msra.mxu0 0
      %440 = vmatprep.subr.bf16.mxu0 0
      %441 = vmatpush1.bf16.msra.mxu0 0
      %442 = vmatprep.subr.bf16.mxu0 0
      %443 = vmatpush1.bf16.msra.mxu0 0
      %444 = vmatprep.subr.bf16.mxu0 0
      %445 = vmatpush1.bf16.msra.mxu0 0
      %446 = vmatprep.subr.bf16.mxu0 0
      %447 = vmatpush1.bf16.msra.mxu0 0
      %448 = vmatprep.subr.bf16.mxu0 0
      %449 = vmatpush1.bf16.msra.mxu0 0
      %450 = vmatprep.subr.bf16.mxu0 0
      %451 = vmatpush1.bf16.msra.mxu0 0
      %452 = vmatprep.subr.bf16.mxu0 0
      %453 = vmatpush1.bf16.msra.mxu0 0
      %454 = vmatprep.subr.bf16.mxu0 0
      %455 = vmatpush1.bf16.msra.mxu0 0
      %456 = vmatprep.subr.bf16.mxu0 0
      %457 = vmatpush1.bf16.msra.mxu0 0
      %458 = vmatprep.subr.bf16.mxu0 0
      %459 = vmatpush1.bf16.msra.mxu0 0
      %460 = vmatprep.subr.bf16.mxu0 0
      %461 = vmatpush1.bf16.msra.mxu0 0
      %462 = vmatprep.subr.bf16.mxu0 0
      %463 = vmatpush1.bf16.msra.mxu0 0
      %464 = vmatprep.mubr.bf16.mxu0 0
      %465 = vmatmul.mubr.bf16.gmra.mrb[0].mxu0 %v381
      %v466 = vpop.f32.mrb[0].mxu0
      %v467 = vadd.f32 0.0, %v466
      %v468 = vpop.f32.mrb[0].mxu0
      %v469 = vpop.f32.mrb[0].mxu0
      %v470 = vadd.f32 0.0, %v469
      %v471 = vpop.f32.mrb[0].mxu0
      %472 = vmatprep.mubr.bf16.mxu0 0
      %473 = vmatmul.mubr.bf16.gmra.mrb[0].mxu0 %v384
      %v474 = vpop.f32.mrb[0].mxu0
      %v475 = vadd.f32 0.0, %v474
      %v476 = vpop.f32.mrb[0].mxu0
      %v477 = vpop.f32.mrb[0].mxu0
      %v478 = vadd.f32 0.0, %v477
      %v479 = vpop.f32.mrb[0].mxu0
      %480 = vmatprep.mubr.bf16.mxu0 0
      %481 = vmatmul.mubr.bf16.gmra.mrb[0].mxu0 %v387
      %v482 = vpop.f32.mrb[0].mxu0
      %v483 = vadd.f32 0.0, %v482
      %v484 = vpop.f32.mrb[0].mxu0
      %v485 = vpop.f32.mrb[0].mxu0
      %v486 = vadd.f32 0.0, %v485
      %v487 = vpop.f32.mrb[0].mxu0
      %488 = vmatprep.mubr.bf16.mxu0 0
      %489 = vmatmul.mubr.bf16.gmra.mrb[0].mxu0 %v390
      %v490 = vpop.f32.mrb[0].mxu0
      %v491 = vadd.f32 0.0, %v490
      %v492 = vpop.f32.mrb[0].mxu0
      %v493 = vpop.f32.mrb[0].mxu0
      %v494 = vadd.f32 0.0, %v493
      %v495 = vpop.f32.mrb[0].mxu0
      %496 = vmatprep.mubr.bf16.mxu0 0
      %497 = vmatmul.mubr.bf16.gmra.mrb[0].mxu0 %v393
      %v498 = vpop.f32.mrb[0].mxu0
      %v499 = vadd.f32 0.0, %v498
      %v500 = vpop.f32.mrb[0].mxu0
      %v501 = vpop.f32.mrb[0].mxu0
      %v502 = vadd.f32 0.0, %v501
      %v503 = vpop.f32.mrb[0].mxu0
      %504 = vmatprep.mubr.bf16.mxu0 0
      %505 = vmatmul.mubr.bf16.gmra.mrb[0].mxu0 %v396
      %v506 = vpop.f32.mrb[0].mxu0
      %v507 = vadd.f32 0.0, %v506
      %v508 = vpop.f32.mrb[0].mxu0
      %v509 = vpop.f32.mrb[0].mxu0
      %v510 = vadd.f32 0.0, %v509
      %v511 = vpop.f32.mrb[0].mxu0
      %512 = vmatprep.mubr.bf16.mxu0 0
      %513 = vmatmul.mubr.bf16.gmra.mrb[0].mxu0 %v399
      %v514 = vpop.f32.mrb[0].mxu0
      %v515 = vadd.f32 0.0, %v514
      %v516 = vpop.f32.mrb[0].mxu0
      %v517 = vpop.f32.mrb[0].mxu0
      %v518 = vadd.f32 0.0, %v517
      %v519 = vpop.f32.mrb[0].mxu0
      %520 = vmatprep.mubr.bf16.mxu0 0
      %521 = vmatmul.mubr.bf16.gmra.mrb[0].mxu0 %v402
      %v522 = vpop.f32.mrb[0].mxu0
      %v523 = vadd.f32 0.0, %v522
      %v524 = vpop.f32.mrb[0].mxu0
      %v525 = vpop.f32.mrb[0].mxu0
      %v526 = vadd.f32 0.0, %v525
      %v527 = vpop.f32.mrb[0].mxu0
      %528 = vmatprep.mubr.bf16.mxu0 0
      %529 = vmatmul.mubr.bf16.gmra.mrb[0].mxu0 %v405
      %v530 = vpop.f32.mrb[0].mxu0
      %v531 = vadd.f32 0.0, %v530
      %v532 = vpop.f32.mrb[0].mxu0
      %v533 = vpop.f32.mrb[0].mxu0
      %v534 = vadd.f32 0.0, %v533
      %v535 = vpop.f32.mrb[0].mxu0
      %536 = vmatprep.mubr.bf16.mxu0 0
      %537 = vmatmul.mubr.bf16.gmra.mrb[0].mxu0 %v408
      %v538 = vpop.f32.mrb[0].mxu0
      %v539 = vadd.f32 0.0, %v538
      %v540 = vpop.f32.mrb[0].mxu0
      %v541 = vpop.f32.mrb[0].mxu0
      %v542 = vadd.f32 0.0, %v541
      %v543 = vpop.f32.mrb[0].mxu0
      %544 = vmatprep.mubr.bf16.mxu0 0
      %545 = vmatmul.mubr.bf16.gmra.mrb[0].mxu0 %v411
      %v546 = vpop.f32.mrb[0].mxu0
      %v547 = vadd.f32 0.0, %v546
      %v548 = vpop.f32.mrb[0].mxu0
      %v549 = vpop.f32.mrb[0].mxu0
      %v550 = vadd.f32 0.0, %v549
      %v551 = vpop.f32.mrb[0].mxu0
      %552 = vmatprep.mubr.bf16.mxu0 0
      %553 = vmatmul.mubr.bf16.gmra.mrb[0].mxu0 %v414
      %v554 = vpop.f32.mrb[0].mxu0
      %v555 = vadd.f32 0.0, %v554
      %v556 = vpop.f32.mrb[0].mxu0
      %v557 = vpop.f32.mrb[0].mxu0
      %v558 = vadd.f32 0.0, %v557
      %v559 = vpop.f32.mrb[0].mxu0
      %560 = vmatprep.mubr.bf16.mxu0 0
      %561 = vmatmul.mubr.bf16.gmra.mrb[0].mxu0 %v417
      %v562 = vpop.f32.mrb[0].mxu0
      %v563 = vadd.f32 0.0, %v562
      %v564 = vpop.f32.mrb[0].mxu0
      %v565 = vpop.f32.mrb[0].mxu0
      %v566 = vadd.f32 0.0, %v565
      %v567 = vpop.f32.mrb[0].mxu0
      %568 = vmatprep.mubr.bf16.mxu0 0
      %569 = vmatmul.mubr.bf16.gmra.mrb[0].mxu0 %v420
      %v570 = vpop.f32.mrb[0].mxu0
      %v571 = vadd.f32 0.0, %v570
      %v572 = vpop.f32.mrb[0].mxu0
      %v573 = vpop.f32.mrb[0].mxu0
      %v574 = vadd.f32 0.0, %v573
      %v575 = vpop.f32.mrb[0].mxu0
      %576 = vmatprep.mubr.bf16.mxu0 0
      %577 = vmatmul.mubr.bf16.gmra.mrb[0].mxu0 %v423
      %v578 = vpop.f32.mrb[0].mxu0
      %v579 = vadd.f32 0.0, %v578
      %v580 = vpop.f32.mrb[0].mxu0
      %v581 = vpop.f32.mrb[0].mxu0
      %v582 = vadd.f32 0.0, %v581
      %v583 = vpop.f32.mrb[0].mxu0
      %584 = vmatprep.mubr.bf16.mxu0 0
      %585 = vmatmul.mubr.bf16.gmra.mrb[0].mxu0 %v426
      %v586 = vpop.f32.mrb[0].mxu0
      %v587 = vadd.f32 0.0, %v586
      %v588 = vpop.f32.mrb[0].mxu0
      %v589 = vpop.f32.mrb[0].mxu0
      %v590 = vadd.f32 0.0, %v589
      %v591 = vpop.f32.mrb[0].mxu0
      %592 = vdwg.mxu0
      %593 = vst [vmem:[#allocation2] sm:$0xff] %v467
      %594 = vst [vmem:[#allocation2 + $0x8] sm:$0xff] %v470
      %595 = vst [vmem:[#allocation2 + $0x10] sm:$0xff] %v475
      %596 = vst [vmem:[#allocation2 + $0x18] sm:$0xff] %v478
      %597 = vst [vmem:[#allocation2 + $0x20] sm:$0xff] %v483
      %598 = vst [vmem:[#allocation2 + $0x28] sm:$0xff] %v486
      %599 = vst [vmem:[#allocation2 + $0x30] sm:$0xff] %v491
      %600 = vst [vmem:[#allocation2 + $0x38] sm:$0xff] %v494
      %601 = vst [vmem:[#allocation2 + $0x40] sm:$0xff] %v499
      %602 = vst [vmem:[#allocation2 + $0x48] sm:$0xff] %v502
      %603 = vst [vmem:[#allocation2 + $0x50] sm:$0xff] %v507
      %604 = vst [vmem:[#allocation2 + $0x58] sm:$0xff] %v510
      %605 = vst [vmem:[#allocation2 + $0x60] sm:$0xff] %v515
      %606 = vst [vmem:[#allocation2 + $0x68] sm:$0xff] %v518
      %607 = vst [vmem:[#allocation2 + $0x70] sm:$0xff] %v523
      %608 = vst [vmem:[#allocation2 + $0x78] sm:$0xff] %v526
      %609 = vst [vmem:[#allocation2 + $0x80] sm:$0xff] %v531
      %610 = vst [vmem:[#allocation2 + $0x88] sm:$0xff] %v534
      %611 = vst [vmem:[#allocation2 + $0x90] sm:$0xff] %v539
      %612 = vst [vmem:[#allocation2 + $0x98] sm:$0xff] %v542
      %613 = vst [vmem:[#allocation2 + $0xa0] sm:$0xff] %v547
      %614 = vst [vmem:[#allocation2 + $0xa8] sm:$0xff] %v550
      %615 = vst [vmem:[#allocation2 + $0xb0] sm:$0xff] %v555
      %616 = vst [vmem:[#allocation2 + $0xb8] sm:$0xff] %v558
      %617 = vst [vmem:[#allocation2 + $0xc0] sm:$0xff] %v563
      %618 = vst [vmem:[#allocation2 + $0xc8] sm:$0xff] %v566
      %619 = vst [vmem:[#allocation2 + $0xd0] sm:$0xff] %v571
      %620 = vst [vmem:[#allocation2 + $0xd8] sm:$0xff] %v574
      %621 = vst [vmem:[#allocation2 + $0xe0] sm:$0xff] %v579
      %622 = vst [vmem:[#allocation2 + $0xe8] sm:$0xff] %v582
      %623 = vst [vmem:[#allocation2 + $0xf0] sm:$0xff] %v587
      %624 = vst [vmem:[#allocation2 + $0xf8] sm:$0xff] %v590
      %s625 = sadd.s32 %s256, 1
      %s626 = smul.u32 %s625, 2
      %s627 = smul.addr %s626, 4
      %s628 = scalar_lea.vmem %s226, %s627
      %v629 = vld [vmem:[%s628] sm:$0xf]
      %v630 = vld [vmem:[%s628 + $0x4] sm:$0xf]
      %v631 = vld [vmem:[%s628 + $0x8] sm:$0xf]
      %v632 = vld [vmem:[%s628 + $0xc] sm:$0xf]
      %v633 = vld [vmem:[%s628 + $0x10] sm:$0xf]
      %v634 = vld [vmem:[%s628 + $0x14] sm:$0xf]
      %v635 = vld [vmem:[%s628 + $0x18] sm:$0xf]
      %v636 = vld [vmem:[%s628 + $0x1c] sm:$0xf]
      %v637 = vld [vmem:[%s628 + $0x20] sm:$0xf]
      %v638 = vld [vmem:[%s628 + $0x24] sm:$0xf]
      %v639 = vld [vmem:[%s628 + $0x28] sm:$0xf]
      %v640 = vld [vmem:[%s628 + $0x2c] sm:$0xf]
      %v641 = vld [vmem:[%s628 + $0x30] sm:$0xf]
      %v642 = vld [vmem:[%s628 + $0x34] sm:$0xf]
      %v643 = vld [vmem:[%s628 + $0x38] sm:$0xf]
      %v644 = vld [vmem:[%s628 + $0x3c] sm:$0xf]
      %v645 = vld [vmem:[%s628 + $0x40] sm:$0xf]
      %v646 = vld [vmem:[%s628 + $0x44] sm:$0xf]
      %v647 = vld [vmem:[%s628 + $0x48] sm:$0xf]
      %v648 = vld [vmem:[%s628 + $0x4c] sm:$0xf]
      %v649 = vld [vmem:[%s628 + $0x50] sm:$0xf]
      %v650 = vld [vmem:[%s628 + $0x54] sm:$0xf]
      %v651 = vld [vmem:[%s628 + $0x58] sm:$0xf]
      %v652 = vld [vmem:[%s628 + $0x5c] sm:$0xf]
      %v653 = vld [vmem:[%s628 + $0x60] sm:$0xf]
      %v654 = vld [vmem:[%s628 + $0x64] sm:$0xf]
      %v655 = vld [vmem:[%s628 + $0x68] sm:$0xf]
      %v656 = vld [vmem:[%s628 + $0x6c] sm:$0xf]
      %v657 = vld [vmem:[%s628 + $0x70] sm:$0xf]
      %v658 = vld [vmem:[%s628 + $0x74] sm:$0xf]
      %v659 = vld [vmem:[%s628 + $0x78] sm:$0xf]
      %v660 = vld [vmem:[%s628 + $0x7c] sm:$0xf]
      %s661 = scalar_lea.vmem %s230, 8
      %v662 = vld [vmem:[%s661] sm:$0xf]
      %v663 = vld [vmem:[%s661 + $0x4] sm:$0x3]
      %v696 = vunpack.c.l.b16 %v629
      %v697 = vunpack.c.l.b16 %v630
      %v698 = vunpack.c.l.b16 %v631
      %v699 = vunpack.c.l.b16 %v632
      %v700 = vunpack.c.l.b16 %v633
      %v701 = vunpack.c.l.b16 %v634
      %v702 = vunpack.c.l.b16 %v635
      %v703 = vunpack.c.l.b16 %v636
      %v704 = vunpack.c.l.b16 %v637
      %v705 = vunpack.c.l.b16 %v638
      %v706 = vunpack.c.l.b16 %v639
      %v707 = vunpack.c.l.b16 %v640
      %v708 = vunpack.c.l.b16 %v641
      %v709 = vunpack.c.l.b16 %v642
      %v710 = vunpack.c.l.b16 %v643
      %v711 = vunpack.c.l.b16 %v644
      %v712 = vunpack.c.l.b16 %v645
      %v713 = vunpack.c.l.b16 %v646
      %v714 = vunpack.c.l.b16 %v647
      %v715 = vunpack.c.l.b16 %v648
      %v716 = vunpack.c.l.b16 %v649
      %v717 = vunpack.c.l.b16 %v650
      %v718 = vunpack.c.l.b16 %v651
      %v719 = vunpack.c.l.b16 %v652
      %v720 = vunpack.c.l.b16 %v653
      %v721 = vunpack.c.l.b16 %v654
      %v722 = vunpack.c.l.b16 %v655
      %v723 = vunpack.c.l.b16 %v656
      %v724 = vunpack.c.l.b16 %v657
      %v725 = vunpack.c.l.b16 %v658
      %v726 = vunpack.c.l.b16 %v659
      %v727 = vunpack.c.l.b16 %v660
      %v728 = vpack.c.b16 %v697, %v696
      %v729 = vpack.c.b16 %v699, %v698
      %v730 = vpack.c.b16 %v701, %v700
      %v731 = vpack.c.b16 %v703, %v702
      %v732 = vpack.c.b16 %v705, %v704
      %v733 = vpack.c.b16 %v707, %v706
      %v734 = vpack.c.b16 %v709, %v708
      %v735 = vpack.c.b16 %v711, %v710
      %v736 = vpack.c.b16 %v713, %v712
      %v737 = vpack.c.b16 %v715, %v714
      %v738 = vpack.c.b16 %v717, %v716
      %v739 = vpack.c.b16 %v719, %v718
      %v740 = vpack.c.b16 %v721, %v720
      %v741 = vpack.c.b16 %v723, %v722
      %v742 = vpack.c.b16 %v725, %v724
      %v743 = vpack.c.b16 %v727, %v726
      %v746 = vunpack.c.l.b16 %v662
      %v747 = vunpack.c.l.b16 %v663
      %v748 = vpack.c.b16 %v747, %v746
      %v750 = vsel %vm379, %v728, 0
      %v753 = vsel %vm379, %v729, 0
      %v756 = vsel %vm379, %v730, 0
      %v759 = vsel %vm379, %v731, 0
      %v762 = vsel %vm379, %v732, 0
      %v765 = vsel %vm379, %v733, 0
      %v768 = vsel %vm379, %v734, 0
      %v771 = vsel %vm379, %v735, 0
      %v774 = vsel %vm379, %v736, 0
      %v777 = vsel %vm379, %v737, 0
      %v780 = vsel %vm379, %v738, 0
      %v783 = vsel %vm379, %v739, 0
      %v786 = vsel %vm379, %v740, 0
      %v789 = vsel %vm379, %v741, 0
      %v792 = vsel %vm379, %v742, 0
      %v795 = vsel %vm379, %v743, 0
      %v798 = vsel %vm428, %v748, 0
      %800 = vmatprep.subr.bf16.mxu0 0
      %801 = vmatpush1.bf16.msra.mxu0 %v798
      %802 = vmatprep.subr.bf16.mxu0 0
      %803 = vmatpush1.bf16.msra.mxu0 0
      %804 = vmatprep.subr.bf16.mxu0 0
      %805 = vmatpush1.bf16.msra.mxu0 0
      %806 = vmatprep.subr.bf16.mxu0 0
      %807 = vmatpush1.bf16.msra.mxu0 0
      %808 = vmatprep.subr.bf16.mxu0 0
      %809 = vmatpush1.bf16.msra.mxu0 0
      %810 = vmatprep.subr.bf16.mxu0 0
      %811 = vmatpush1.bf16.msra.mxu0 0
      %812 = vmatprep.subr.bf16.mxu0 0
      %813 = vmatpush1.bf16.msra.mxu0 0
      %814 = vmatprep.subr.bf16.mxu0 0
      %815 = vmatpush1.bf16.msra.mxu0 0
      %816 = vmatprep.subr.bf16.mxu0 0
      %817 = vmatpush1.bf16.msra.mxu0 0
      %818 = vmatprep.subr.bf16.mxu0 0
      %819 = vmatpush1.bf16.msra.mxu0 0
      %820 = vmatprep.subr.bf16.mxu0 0
      %821 = vmatpush1.bf16.msra.mxu0 0
      %822 = vmatprep.subr.bf16.mxu0 0
      %823 = vmatpush1.bf16.msra.mxu0 0
      %824 = vmatprep.subr.bf16.mxu0 0
      %825 = vmatpush1.bf16.msra.mxu0 0
      %826 = vmatprep.subr.bf16.mxu0 0
      %827 = vmatpush1.bf16.msra.mxu0 0
      %828 = vmatprep.subr.bf16.mxu0 0
      %829 = vmatpush1.bf16.msra.mxu0 0
      %830 = vmatprep.subr.bf16.mxu0 0
      %831 = vmatpush1.bf16.msra.mxu0 0
      %832 = vmatprep.mubr.bf16.mxu0 0
      %833 = vmatmul.mubr.bf16.gmra.mrb[0].mxu0 %v750
      %v834 = vpop.f32.mrb[0].mxu0
      %v835 = vadd.f32 0.0, %v834
      %v836 = vpop.f32.mrb[0].mxu0
      %v837 = vpop.f32.mrb[0].mxu0
      %v838 = vadd.f32 0.0, %v837
      %v839 = vpop.f32.mrb[0].mxu0
      %840 = vmatprep.mubr.bf16.mxu0 0
      %841 = vmatmul.mubr.bf16.gmra.mrb[0].mxu0 %v753
      %v842 = vpop.f32.mrb[0].mxu0
      %v843 = vadd.f32 0.0, %v842
      %v844 = vpop.f32.mrb[0].mxu0
      %v845 = vpop.f32.mrb[0].mxu0
      %v846 = vadd.f32 0.0, %v845
      %v847 = vpop.f32.mrb[0].mxu0
      %848 = vmatprep.mubr.bf16.mxu0 0
      %849 = vmatmul.mubr.bf16.gmra.mrb[0].mxu0 %v756
      %v850 = vpop.f32.mrb[0].mxu0
      %v851 = vadd.f32 0.0, %v850
      %v852 = vpop.f32.mrb[0].mxu0
      %v853 = vpop.f32.mrb[0].mxu0
      %v854 = vadd.f32 0.0, %v853
      %v855 = vpop.f32.mrb[0].mxu0
      %856 = vmatprep.mubr.bf16.mxu0 0
      %857 = vmatmul.mubr.bf16.gmra.mrb[0].mxu0 %v759
      %v858 = vpop.f32.mrb[0].mxu0
      %v859 = vadd.f32 0.0, %v858
      %v860 = vpop.f32.mrb[0].mxu0
      %v861 = vpop.f32.mrb[0].mxu0
      %v862 = vadd.f32 0.0, %v861
      %v863 = vpop.f32.mrb[0].mxu0
      %864 = vmatprep.mubr.bf16.mxu0 0
      %865 = vmatmul.mubr.bf16.gmra.mrb[0].mxu0 %v762
      %v866 = vpop.f32.mrb[0].mxu0
      %v867 = vadd.f32 0.0, %v866
      %v868 = vpop.f32.mrb[0].mxu0
      %v869 = vpop.f32.mrb[0].mxu0
      %v870 = vadd.f32 0.0, %v869
      %v871 = vpop.f32.mrb[0].mxu0
      %872 = vmatprep.mubr.bf16.mxu0 0
      %873 = vmatmul.mubr.bf16.gmra.mrb[0].mxu0 %v765
      %v874 = vpop.f32.mrb[0].mxu0
      %v875 = vadd.f32 0.0, %v874
      %v876 = vpop.f32.mrb[0].mxu0
      %v877 = vpop.f32.mrb[0].mxu0
      %v878 = vadd.f32 0.0, %v877
      %v879 = vpop.f32.mrb[0].mxu0
      %880 = vmatprep.mubr.bf16.mxu0 0
      %881 = vmatmul.mubr.bf16.gmra.mrb[0].mxu0 %v768
      %v882 = vpop.f32.mrb[0].mxu0
      %v883 = vadd.f32 0.0, %v882
      %v884 = vpop.f32.mrb[0].mxu0
      %v885 = vpop.f32.mrb[0].mxu0
      %v886 = vadd.f32 0.0, %v885
      %v887 = vpop.f32.mrb[0].mxu0
      %888 = vmatprep.mubr.bf16.mxu0 0
      %889 = vmatmul.mubr.bf16.gmra.mrb[0].mxu0 %v771
      %v890 = vpop.f32.mrb[0].mxu0
      %v891 = vadd.f32 0.0, %v890
      %v892 = vpop.f32.mrb[0].mxu0
      %v893 = vpop.f32.mrb[0].mxu0
      %v894 = vadd.f32 0.0, %v893
      %v895 = vpop.f32.mrb[0].mxu0
      %896 = vmatprep.mubr.bf16.mxu0 0
      %897 = vmatmul.mubr.bf16.gmra.mrb[0].mxu0 %v774
      %v898 = vpop.f32.mrb[0].mxu0
      %v899 = vadd.f32 0.0, %v898
      %v900 = vpop.f32.mrb[0].mxu0
      %v901 = vpop.f32.mrb[0].mxu0
      %v902 = vadd.f32 0.0, %v901
      %v903 = vpop.f32.mrb[0].mxu0
      %904 = vmatprep.mubr.bf16.mxu0 0
      %905 = vmatmul.mubr.bf16.gmra.mrb[0].mxu0 %v777
      %v906 = vpop.f32.mrb[0].mxu0
      %v907 = vadd.f32 0.0, %v906
      %v908 = vpop.f32.mrb[0].mxu0
      %v909 = vpop.f32.mrb[0].mxu0
      %v910 = vadd.f32 0.0, %v909
      %v911 = vpop.f32.mrb[0].mxu0
      %912 = vmatprep.mubr.bf16.mxu0 0
      %913 = vmatmul.mubr.bf16.gmra.mrb[0].mxu0 %v780
      %v914 = vpop.f32.mrb[0].mxu0
      %v915 = vadd.f32 0.0, %v914
      %v916 = vpop.f32.mrb[0].mxu0
      %v917 = vpop.f32.mrb[0].mxu0
      %v918 = vadd.f32 0.0, %v917
      %v919 = vpop.f32.mrb[0].mxu0
      %920 = vmatprep.mubr.bf16.mxu0 0
      %921 = vmatmul.mubr.bf16.gmra.mrb[0].mxu0 %v783
      %v922 = vpop.f32.mrb[0].mxu0
      %v923 = vadd.f32 0.0, %v922
      %v924 = vpop.f32.mrb[0].mxu0
      %v925 = vpop.f32.mrb[0].mxu0
      %v926 = vadd.f32 0.0, %v925
      %v927 = vpop.f32.mrb[0].mxu0
      %928 = vmatprep.mubr.bf16.mxu0 0
      %929 = vmatmul.mubr.bf16.gmra.mrb[0].mxu0 %v786
      %v930 = vpop.f32.mrb[0].mxu0
      %v931 = vadd.f32 0.0, %v930
      %v932 = vpop.f32.mrb[0].mxu0
      %v933 = vpop.f32.mrb[0].mxu0
      %v934 = vadd.f32 0.0, %v933
      %v935 = vpop.f32.mrb[0].mxu0
      %936 = vmatprep.mubr.bf16.mxu0 0
      %937 = vmatmul.mubr.bf16.gmra.mrb[0].mxu0 %v789
      %v938 = vpop.f32.mrb[0].mxu0
      %v939 = vadd.f32 0.0, %v938
      %v940 = vpop.f32.mrb[0].mxu0
      %v941 = vpop.f32.mrb[0].mxu0
      %v942 = vadd.f32 0.0, %v941
      %v943 = vpop.f32.mrb[0].mxu0
      %944 = vmatprep.mubr.bf16.mxu0 0
      %945 = vmatmul.mubr.bf16.gmra.mrb[0].mxu0 %v792
      %v946 = vpop.f32.mrb[0].mxu0
      %v947 = vadd.f32 0.0, %v946
      %v948 = vpop.f32.mrb[0].mxu0
      %v949 = vpop.f32.mrb[0].mxu0
      %v950 = vadd.f32 0.0, %v949
      %v951 = vpop.f32.mrb[0].mxu0
      %952 = vmatprep.mubr.bf16.mxu0 0
      %953 = vmatmul.mubr.bf16.gmra.mrb[0].mxu0 %v795
      %v954 = vpop.f32.mrb[0].mxu0
      %v955 = vadd.f32 0.0, %v954
      %v956 = vpop.f32.mrb[0].mxu0
      %v957 = vpop.f32.mrb[0].mxu0
      %v958 = vadd.f32 0.0, %v957
      %v959 = vpop.f32.mrb[0].mxu0
      %960 = vdwg.mxu0
      %v961 = vld [vmem:[#allocation2] sm:$0xff]
      %v962 = vld [vmem:[#allocation2 + $0x8] sm:$0xff]
      %v963 = vld [vmem:[#allocation2 + $0x10] sm:$0xff]
      %v964 = vld [vmem:[#allocation2 + $0x18] sm:$0xff]
      %v965 = vld [vmem:[#allocation2 + $0x20] sm:$0xff]
      %v966 = vld [vmem:[#allocation2 + $0x28] sm:$0xff]
      %v967 = vld [vmem:[#allocation2 + $0x30] sm:$0xff]
      %v968 = vld [vmem:[#allocation2 + $0x38] sm:$0xff]
      %v969 = vld [vmem:[#allocation2 + $0x40] sm:$0xff]
      %v970 = vld [vmem:[#allocation2 + $0x48] sm:$0xff]
      %v971 = vld [vmem:[#allocation2 + $0x50] sm:$0xff]
      %v972 = vld [vmem:[#allocation2 + $0x58] sm:$0xff]
      %v973 = vld [vmem:[#allocation2 + $0x60] sm:$0xff]
      %v974 = vld [vmem:[#allocation2 + $0x68] sm:$0xff]
      %v975 = vld [vmem:[#allocation2 + $0x70] sm:$0xff]
      %v976 = vld [vmem:[#allocation2 + $0x78] sm:$0xff]
      %v977 = vld [vmem:[#allocation2 + $0x80] sm:$0xff]
      %v978 = vld [vmem:[#allocation2 + $0x88] sm:$0xff]
      %v979 = vld [vmem:[#allocation2 + $0x90] sm:$0xff]
      %v980 = vld [vmem:[#allocation2 + $0x98] sm:$0xff]
      %v981 = vld [vmem:[#allocation2 + $0xa0] sm:$0xff]
      %v982 = vld [vmem:[#allocation2 + $0xa8] sm:$0xff]
      %v983 = vld [vmem:[#allocation2 + $0xb0] sm:$0xff]
      %v984 = vld [vmem:[#allocation2 + $0xb8] sm:$0xff]
      %v985 = vld [vmem:[#allocation2 + $0xc0] sm:$0xff]
      %v986 = vld [vmem:[#allocation2 + $0xc8] sm:$0xff]
      %v987 = vld [vmem:[#allocation2 + $0xd0] sm:$0xff]
      %v988 = vld [vmem:[#allocation2 + $0xd8] sm:$0xff]
      %v989 = vld [vmem:[#allocation2 + $0xe0] sm:$0xff]
      %v990 = vld [vmem:[#allocation2 + $0xe8] sm:$0xff]
      %v991 = vld [vmem:[#allocation2 + $0xf0] sm:$0xff]
      %v992 = vld [vmem:[#allocation2 + $0xf8] sm:$0xff]
      %v993 = vadd.f32 %v961, %v835
      %v994 = vadd.f32 %v962, %v838
      %v995 = vadd.f32 %v963, %v843
      %v996 = vadd.f32 %v964, %v846
      %v997 = vadd.f32 %v965, %v851
      %v998 = vadd.f32 %v966, %v854
      %v999 = vadd.f32 %v967, %v859
      %v1000 = vadd.f32 %v968, %v862
      %v1001 = vadd.f32 %v969, %v867
      %v1002 = vadd.f32 %v970, %v870
      %v1003 = vadd.f32 %v971, %v875
      %v1004 = vadd.f32 %v972, %v878
      %v1005 = vadd.f32 %v973, %v883
      %v1006 = vadd.f32 %v974, %v886
      %v1007 = vadd.f32 %v975, %v891
      %v1008 = vadd.f32 %v976, %v894
      %v1009 = vadd.f32 %v977, %v899
      %v1010 = vadd.f32 %v978, %v902
      %v1011 = vadd.f32 %v979, %v907
      %v1012 = vadd.f32 %v980, %v910
      %v1013 = vadd.f32 %v981, %v915
      %v1014 = vadd.f32 %v982, %v918
      %v1015 = vadd.f32 %v983, %v923
      %v1016 = vadd.f32 %v984, %v926
      %v1017 = vadd.f32 %v985, %v931
      %v1018 = vadd.f32 %v986, %v934
      %v1019 = vadd.f32 %v987, %v939
      %v1020 = vadd.f32 %v988, %v942
      %v1021 = vadd.f32 %v989, %v947
      %v1022 = vadd.f32 %v990, %v950
      %v1023 = vadd.f32 %v991, %v955
      %v1024 = vadd.f32 %v992, %v958
      %1025 = vst [vmem:[#allocation2] sm:$0xff] %v993
      %1026 = vst [vmem:[#allocation2 + $0x8] sm:$0xff] %v994
      %1027 = vst [vmem:[#allocation2 + $0x10] sm:$0xff] %v995
      %1028 = vst [vmem:[#allocation2 + $0x18] sm:$0xff] %v996
      %1029 = vst [vmem:[#allocation2 + $0x20] sm:$0xff] %v997
      %1030 = vst [vmem:[#allocation2 + $0x28] sm:$0xff] %v998
      %1031 = vst [vmem:[#allocation2 + $0x30] sm:$0xff] %v999
      %1032 = vst [vmem:[#allocation2 + $0x38] sm:$0xff] %v1000
      %1033 = vst [vmem:[#allocation2 + $0x40] sm:$0xff] %v1001
      %1034 = vst [vmem:[#allocation2 + $0x48] sm:$0xff] %v1002
      %1035 = vst [vmem:[#allocation2 + $0x50] sm:$0xff] %v1003
      %1036 = vst [vmem:[#allocation2 + $0x58] sm:$0xff] %v1004
      %1037 = vst [vmem:[#allocation2 + $0x60] sm:$0xff] %v1005
      %1038 = vst [vmem:[#allocation2 + $0x68] sm:$0xff] %v1006
      %1039 = vst [vmem:[#allocation2 + $0x70] sm:$0xff] %v1007
      %1040 = vst [vmem:[#allocation2 + $0x78] sm:$0xff] %v1008
      %1041 = vst [vmem:[#allocation2 + $0x80] sm:$0xff] %v1009
      %1042 = vst [vmem:[#allocation2 + $0x88] sm:$0xff] %v1010
      %1043 = vst [vmem:[#allocation2 + $0x90] sm:$0xff] %v1011
      %1044 = vst [vmem:[#allocation2 + $0x98] sm:$0xff] %v1012
      %1045 = vst [vmem:[#allocation2 + $0xa0] sm:$0xff] %v1013
      %1046 = vst [vmem:[#allocation2 + $0xa8] sm:$0xff] %v1014
      %1047 = vst [vmem:[#allocation2 + $0xb0] sm:$0xff] %v1015
      %1048 = vst [vmem:[#allocation2 + $0xb8] sm:$0xff] %v1016
      %1049 = vst [vmem:[#allocation2 + $0xc0] sm:$0xff] %v1017
      %1050 = vst [vmem:[#allocation2 + $0xc8] sm:$0xff] %v1018
      %1051 = vst [vmem:[#allocation2 + $0xd0] sm:$0xff] %v1019
      %1052 = vst [vmem:[#allocation2 + $0xd8] sm:$0xff] %v1020
      %1053 = vst [vmem:[#allocation2 + $0xe0] sm:$0xff] %v1021
      %1054 = vst [vmem:[#allocation2 + $0xe8] sm:$0xff] %v1022
      %1055 = vst [vmem:[#allocation2 + $0xf0] sm:$0xff] %v1023
      %1056 = vst [vmem:[#allocation2 + $0xf8] sm:$0xff] %v1024
      %s1057 = sadd.s32 %s256, 2
      %s1058 = smul.u32 %s1057, 2
      %s1059 = smul.addr %s1058, 4
      %s1060 = scalar_lea.vmem %s226, %s1059
      %v1061 = vld [vmem:[%s1060] sm:$0xf]
      %v1062 = vld [vmem:[%s1060 + $0x4] sm:$0xf]
      %v1063 = vld [vmem:[%s1060 + $0x8] sm:$0xf]
      %v1064 = vld [vmem:[%s1060 + $0xc] sm:$0xf]
      %v1065 = vld [vmem:[%s1060 + $0x10] sm:$0xf]
      %v1066 = vld [vmem:[%s1060 + $0x14] sm:$0xf]
      %v1067 = vld [vmem:[%s1060 + $0x18] sm:$0xf]
      %v1068 = vld [vmem:[%s1060 + $0x1c] sm:$0xf]
      %v1069 = vld [vmem:[%s1060 + $0x20] sm:$0xf]
      %v1070 = vld [vmem:[%s1060 + $0x24] sm:$0xf]
      %v1071 = vld [vmem:[%s1060 + $0x28] sm:$0xf]
      %v1072 = vld [vmem:[%s1060 + $0x2c] sm:$0xf]
      %v1073 = vld [vmem:[%s1060 + $0x30] sm:$0xf]
      %v1074 = vld [vmem:[%s1060 + $0x34] sm:$0xf]
      %v1075 = vld [vmem:[%s1060 + $0x38] sm:$0xf]
      %v1076 = vld [vmem:[%s1060 + $0x3c] sm:$0xf]
      %v1077 = vld [vmem:[%s1060 + $0x40] sm:$0xf]
      %v1078 = vld [vmem:[%s1060 + $0x44] sm:$0xf]
      %v1079 = vld [vmem:[%s1060 + $0x48] sm:$0xf]
      %v1080 = vld [vmem:[%s1060 + $0x4c] sm:$0xf]
      %v1081 = vld [vmem:[%s1060 + $0x50] sm:$0xf]
      %v1082 = vld [vmem:[%s1060 + $0x54] sm:$0xf]
      %v1083 = vld [vmem:[%s1060 + $0x58] sm:$0xf]
      %v1084 = vld [vmem:[%s1060 + $0x5c] sm:$0xf]
      %v1085 = vld [vmem:[%s1060 + $0x60] sm:$0xf]
      %v1086 = vld [vmem:[%s1060 + $0x64] sm:$0xf]
      %v1087 = vld [vmem:[%s1060 + $0x68] sm:$0xf]
      %v1088 = vld [vmem:[%s1060 + $0x6c] sm:$0xf]
      %v1089 = vld [vmem:[%s1060 + $0x70] sm:$0xf]
      %v1090 = vld [vmem:[%s1060 + $0x74] sm:$0xf]
      %v1091 = vld [vmem:[%s1060 + $0x78] sm:$0xf]
      %v1092 = vld [vmem:[%s1060 + $0x7c] sm:$0xf]
      %s1093 = scalar_lea.vmem %s230, 16
      %v1094 = vld [vmem:[%s1093] sm:$0xf]
      %v1095 = vld [vmem:[%s1093 + $0x4] sm:$0x3]
      %v1128 = vunpack.c.l.b16 %v1061
      %v1129 = vunpack.c.l.b16 %v1062
      %v1130 = vunpack.c.l.b16 %v1063
      %v1131 = vunpack.c.l.b16 %v1064
      %v1132 = vunpack.c.l.b16 %v1065
      %v1133 = vunpack.c.l.b16 %v1066
      %v1134 = vunpack.c.l.b16 %v1067
      %v1135 = vunpack.c.l.b16 %v1068
      %v1136 = vunpack.c.l.b16 %v1069
      %v1137 = vunpack.c.l.b16 %v1070
      %v1138 = vunpack.c.l.b16 %v1071
      %v1139 = vunpack.c.l.b16 %v1072
      %v1140 = vunpack.c.l.b16 %v1073
      %v1141 = vunpack.c.l.b16 %v1074
      %v1142 = vunpack.c.l.b16 %v1075
      %v1143 = vunpack.c.l.b16 %v1076
      %v1144 = vunpack.c.l.b16 %v1077
      %v1145 = vunpack.c.l.b16 %v1078
      %v1146 = vunpack.c.l.b16 %v1079
      %v1147 = vunpack.c.l.b16 %v1080
      %v1148 = vunpack.c.l.b16 %v1081
      %v1149 = vunpack.c.l.b16 %v1082
      %v1150 = vunpack.c.l.b16 %v1083
      %v1151 = vunpack.c.l.b16 %v1084
      %v1152 = vunpack.c.l.b16 %v1085
      %v1153 = vunpack.c.l.b16 %v1086
      %v1154 = vunpack.c.l.b16 %v1087
      %v1155 = vunpack.c.l.b16 %v1088
      %v1156 = vunpack.c.l.b16 %v1089
      %v1157 = vunpack.c.l.b16 %v1090
      %v1158 = vunpack.c.l.b16 %v1091
      %v1159 = vunpack.c.l.b16 %v1092
      %v1160 = vpack.c.b16 %v1129, %v1128
      %v1161 = vpack.c.b16 %v1131, %v1130
      %v1162 = vpack.c.b16 %v1133, %v1132
      %v1163 = vpack.c.b16 %v1135, %v1134
      %v1164 = vpack.c.b16 %v1137, %v1136
      %v1165 = vpack.c.b16 %v1139, %v1138
      %v1166 = vpack.c.b16 %v1141, %v1140
      %v1167 = vpack.c.b16 %v1143, %v1142
      %v1168 = vpack.c.b16 %v1145, %v1144
      %v1169 = vpack.c.b16 %v1147, %v1146
      %v1170 = vpack.c.b16 %v1149, %v1148
      %v1171 = vpack.c.b16 %v1151, %v1150
      %v1172 = vpack.c.b16 %v1153, %v1152
      %v1173 = vpack.c.b16 %v1155, %v1154
      %v1174 = vpack.c.b16 %v1157, %v1156
      %v1175 = vpack.c.b16 %v1159, %v1158
      %v1178 = vunpack.c.l.b16 %v1094
      %v1179 = vunpack.c.l.b16 %v1095
      %v1180 = vpack.c.b16 %v1179, %v1178
      %v1182 = vsel %vm379, %v1160, 0
      %v1185 = vsel %vm379, %v1161, 0
      %v1188 = vsel %vm379, %v1162, 0
      %v1191 = vsel %vm379, %v1163, 0
      %v1194 = vsel %vm379, %v1164, 0
      %v1197 = vsel %vm379, %v1165, 0
      %v1200 = vsel %vm379, %v1166, 0
      %v1203 = vsel %vm379, %v1167, 0
      %v1206 = vsel %vm379, %v1168, 0
      %v1209 = vsel %vm379, %v1169, 0
      %v1212 = vsel %vm379, %v1170, 0
      %v1215 = vsel %vm379, %v1171, 0
      %v1218 = vsel %vm379, %v1172, 0
      %v1221 = vsel %vm379, %v1173, 0
      %v1224 = vsel %vm379, %v1174, 0
      %v1227 = vsel %vm379, %v1175, 0
      %v1230 = vsel %vm428, %v1180, 0
      %1232 = vmatprep.subr.bf16.mxu0 0
      %1233 = vmatpush1.bf16.msra.mxu0 %v1230
      %1234 = vmatprep.subr.bf16.mxu0 0
      %1235 = vmatpush1.bf16.msra.mxu0 0
      %1236 = vmatprep.subr.bf16.mxu0 0
      %1237 = vmatpush1.bf16.msra.mxu0 0
      %1238 = vmatprep.subr.bf16.mxu0 0
      %1239 = vmatpush1.bf16.msra.mxu0 0
      %1240 = vmatprep.subr.bf16.mxu0 0
      %1241 = vmatpush1.bf16.msra.mxu0 0
      %1242 = vmatprep.subr.bf16.mxu0 0
      %1243 = vmatpush1.bf16.msra.mxu0 0
      %1244 = vmatprep.subr.bf16.mxu0 0
      %1245 = vmatpush1.bf16.msra.mxu0 0
      %1246 = vmatprep.subr.bf16.mxu0 0
      %1247 = vmatpush1.bf16.msra.mxu0 0
      %1248 = vmatprep.subr.bf16.mxu0 0
      %1249 = vmatpush1.bf16.msra.mxu0 0
      %1250 = vmatprep.subr.bf16.mxu0 0
      %1251 = vmatpush1.bf16.msra.mxu0 0
      %1252 = vmatprep.subr.bf16.mxu0 0
      %1253 = vmatpush1.bf16.msra.mxu0 0
      %1254 = vmatprep.subr.bf16.mxu0 0
      %1255 = vmatpush1.bf16.msra.mxu0 0
      %1256 = vmatprep.subr.bf16.mxu0 0
      %1257 = vmatpush1.bf16.msra.mxu0 0
      %1258 = vmatprep.subr.bf16.mxu0 0
      %1259 = vmatpush1.bf16.msra.mxu0 0
      %1260 = vmatprep.subr.bf16.mxu0 0
      %1261 = vmatpush1.bf16.msra.mxu0 0
      %1262 = vmatprep.subr.bf16.mxu0 0
      %1263 = vmatpush1.bf16.msra.mxu0 0
      %1264 = vmatprep.mubr.bf16.mxu0 0
      %1265 = vmatmul.mubr.bf16.gmra.mrb[0].mxu0 %v1182
      %v1266 = vpop.f32.mrb[0].mxu0
      %v1267 = vadd.f32 0.0, %v1266
      %v1268 = vpop.f32.mrb[0].mxu0
      %v1269 = vpop.f32.mrb[0].mxu0
      %v1270 = vadd.f32 0.0, %v1269
      %v1271 = vpop.f32.mrb[0].mxu0
      %1272 = vmatprep.mubr.bf16.mxu0 0
      %1273 = vmatmul.mubr.bf16.gmra.mrb[0].mxu0 %v1185
      %v1274 = vpop.f32.mrb[0].mxu0
      %v1275 = vadd.f32 0.0, %v1274
      %v1276 = vpop.f32.mrb[0].mxu0
      %v1277 = vpop.f32.mrb[0].mxu0
      %v1278 = vadd.f32 0.0, %v1277
      %v1279 = vpop.f32.mrb[0].mxu0
      %1280 = vmatprep.mubr.bf16.mxu0 0
      %1281 = vmatmul.mubr.bf16.gmra.mrb[0].mxu0 %v1188
      %v1282 = vpop.f32.mrb[0].mxu0
      %v1283 = vadd.f32 0.0, %v1282
      %v1284 = vpop.f32.mrb[0].mxu0
      %v1285 = vpop.f32.mrb[0].mxu0
      %v1286 = vadd.f32 0.0, %v1285
      %v1287 = vpop.f32.mrb[0].mxu0
      %1288 = vmatprep.mubr.bf16.mxu0 0
      %1289 = vmatmul.mubr.bf16.gmra.mrb[0].mxu0 %v1191
      %v1290 = vpop.f32.mrb[0].mxu0
      %v1291 = vadd.f32 0.0, %v1290
      %v1292 = vpop.f32.mrb[0].mxu0
      %v1293 = vpop.f32.mrb[0].mxu0
      %v1294 = vadd.f32 0.0, %v1293
      %v1295 = vpop.f32.mrb[0].mxu0
      %1296 = vmatprep.mubr.bf16.mxu0 0
      %1297 = vmatmul.mubr.bf16.gmra.mrb[0].mxu0 %v1194
      %v1298 = vpop.f32.mrb[0].mxu0
      %v1299 = vadd.f32 0.0, %v1298
      %v1300 = vpop.f32.mrb[0].mxu0
      %v1301 = vpop.f32.mrb[0].mxu0
      %v1302 = vadd.f32 0.0, %v1301
      %v1303 = vpop.f32.mrb[0].mxu0
      %1304 = vmatprep.mubr.bf16.mxu0 0
      %1305 = vmatmul.mubr.bf16.gmra.mrb[0].mxu0 %v1197
      %v1306 = vpop.f32.mrb[0].mxu0
      %v1307 = vadd.f32 0.0, %v1306
      %v1308 = vpop.f32.mrb[0].mxu0
      %v1309 = vpop.f32.mrb[0].mxu0
      %v1310 = vadd.f32 0.0, %v1309
      %v1311 = vpop.f32.mrb[0].mxu0
      %1312 = vmatprep.mubr.bf16.mxu0 0
      %1313 = vmatmul.mubr.bf16.gmra.mrb[0].mxu0 %v1200
      %v1314 = vpop.f32.mrb[0].mxu0
      %v1315 = vadd.f32 0.0, %v1314
      %v1316 = vpop.f32.mrb[0].mxu0
      %v1317 = vpop.f32.mrb[0].mxu0
      %v1318 = vadd.f32 0.0, %v1317
      %v1319 = vpop.f32.mrb[0].mxu0
      %1320 = vmatprep.mubr.bf16.mxu0 0
      %1321 = vmatmul.mubr.bf16.gmra.mrb[0].mxu0 %v1203
      %v1322 = vpop.f32.mrb[0].mxu0
      %v1323 = vadd.f32 0.0, %v1322
      %v1324 = vpop.f32.mrb[0].mxu0
      %v1325 = vpop.f32.mrb[0].mxu0
      %v1326 = vadd.f32 0.0, %v1325
      %v1327 = vpop.f32.mrb[0].mxu0
      %1328 = vmatprep.mubr.bf16.mxu0 0
      %1329 = vmatmul.mubr.bf16.gmra.mrb[0].mxu0 %v1206
      %v1330 = vpop.f32.mrb[0].mxu0
      %v1331 = vadd.f32 0.0, %v1330
      %v1332 = vpop.f32.mrb[0].mxu0
      %v1333 = vpop.f32.mrb[0].mxu0
      %v1334 = vadd.f32 0.0, %v1333
      %v1335 = vpop.f32.mrb[0].mxu0
      %1336 = vmatprep.mubr.bf16.mxu0 0
      %1337 = vmatmul.mubr.bf16.gmra.mrb[0].mxu0 %v1209
      %v1338 = vpop.f32.mrb[0].mxu0
      %v1339 = vadd.f32 0.0, %v1338
      %v1340 = vpop.f32.mrb[0].mxu0
      %v1341 = vpop.f32.mrb[0].mxu0
      %v1342 = vadd.f32 0.0, %v1341
      %v1343 = vpop.f32.mrb[0].mxu0
      %1344 = vmatprep.mubr.bf16.mxu0 0
      %1345 = vmatmul.mubr.bf16.gmra.mrb[0].mxu0 %v1212
      %v1346 = vpop.f32.mrb[0].mxu0
      %v1347 = vadd.f32 0.0, %v1346
      %v1348 = vpop.f32.mrb[0].mxu0
      %v1349 = vpop.f32.mrb[0].mxu0
      %v1350 = vadd.f32 0.0, %v1349
      %v1351 = vpop.f32.mrb[0].mxu0
      %1352 = vmatprep.mubr.bf16.mxu0 0
      %1353 = vmatmul.mubr.bf16.gmra.mrb[0].mxu0 %v1215
      %v1354 = vpop.f32.mrb[0].mxu0
      %v1355 = vadd.f32 0.0, %v1354
      %v1356 = vpop.f32.mrb[0].mxu0
      %v1357 = vpop.f32.mrb[0].mxu0
      %v1358 = vadd.f32 0.0, %v1357
      %v1359 = vpop.f32.mrb[0].mxu0
      %1360 = vmatprep.mubr.bf16.mxu0 0
      %1361 = vmatmul.mubr.bf16.gmra.mrb[0].mxu0 %v1218
      %v1362 = vpop.f32.mrb[0].mxu0
      %v1363 = vadd.f32 0.0, %v1362
      %v1364 = vpop.f32.mrb[0].mxu0
      %v1365 = vpop.f32.mrb[0].mxu0
      %v1366 = vadd.f32 0.0, %v1365
      %v1367 = vpop.f32.mrb[0].mxu0
      %1368 = vmatprep.mubr.bf16.mxu0 0
      %1369 = vmatmul.mubr.bf16.gmra.mrb[0].mxu0 %v1221
      %v1370 = vpop.f32.mrb[0].mxu0
      %v1371 = vadd.f32 0.0, %v1370
      %v1372 = vpop.f32.mrb[0].mxu0
      %v1373 = vpop.f32.mrb[0].mxu0
      %v1374 = vadd.f32 0.0, %v1373
      %v1375 = vpop.f32.mrb[0].mxu0
      %1376 = vmatprep.mubr.bf16.mxu0 0
      %1377 = vmatmul.mubr.bf16.gmra.mrb[0].mxu0 %v1224
      %v1378 = vpop.f32.mrb[0].mxu0
      %v1379 = vadd.f32 0.0, %v1378
      %v1380 = vpop.f32.mrb[0].mxu0
      %v1381 = vpop.f32.mrb[0].mxu0
      %v1382 = vadd.f32 0.0, %v1381
      %v1383 = vpop.f32.mrb[0].mxu0
      %1384 = vmatprep.mubr.bf16.mxu0 0
      %1385 = vmatmul.mubr.bf16.gmra.mrb[0].mxu0 %v1227
      %v1386 = vpop.f32.mrb[0].mxu0
      %v1387 = vadd.f32 0.0, %v1386
      %v1388 = vpop.f32.mrb[0].mxu0
      %v1389 = vpop.f32.mrb[0].mxu0
      %v1390 = vadd.f32 0.0, %v1389
      %v1391 = vpop.f32.mrb[0].mxu0
      %1392 = vdwg.mxu0
      %v1393 = vld [vmem:[#allocation2] sm:$0xff]
      %v1394 = vld [vmem:[#allocation2 + $0x8] sm:$0xff]
      %v1395 = vld [vmem:[#allocation2 + $0x10] sm:$0xff]
      %v1396 = vld [vmem:[#allocation2 + $0x18] sm:$0xff]
      %v1397 = vld [vmem:[#allocation2 + $0x20] sm:$0xff]
      %v1398 = vld [vmem:[#allocation2 + $0x28] sm:$0xff]
      %v1399 = vld [vmem:[#allocation2 + $0x30] sm:$0xff]
      %v1400 = vld [vmem:[#allocation2 + $0x38] sm:$0xff]
      %v1401 = vld [vmem:[#allocation2 + $0x40] sm:$0xff]
      %v1402 = vld [vmem:[#allocation2 + $0x48] sm:$0xff]
      %v1403 = vld [vmem:[#allocation2 + $0x50] sm:$0xff]
      %v1404 = vld [vmem:[#allocation2 + $0x58] sm:$0xff]
      %v1405 = vld [vmem:[#allocation2 + $0x60] sm:$0xff]
      %v1406 = vld [vmem:[#allocation2 + $0x68] sm:$0xff]
      %v1407 = vld [vmem:[#allocation2 + $0x70] sm:$0xff]
      %v1408 = vld [vmem:[#allocation2 + $0x78] sm:$0xff]
      %v1409 = vld [vmem:[#allocation2 + $0x80] sm:$0xff]
      %v1410 = vld [vmem:[#allocation2 + $0x88] sm:$0xff]
      %v1411 = vld [vmem:[#allocation2 + $0x90] sm:$0xff]
      %v1412 = vld [vmem:[#allocation2 + $0x98] sm:$0xff]
      %v1413 = vld [vmem:[#allocation2 + $0xa0] sm:$0xff]
      %v1414 = vld [vmem:[#allocation2 + $0xa8] sm:$0xff]
      %v1415 = vld [vmem:[#allocation2 + $0xb0] sm:$0xff]
      %v1416 = vld [vmem:[#allocation2 + $0xb8] sm:$0xff]
      %v1417 = vld [vmem:[#allocation2 + $0xc0] sm:$0xff]
      %v1418 = vld [vmem:[#allocation2 + $0xc8] sm:$0xff]
      %v1419 = vld [vmem:[#allocation2 + $0xd0] sm:$0xff]
      %v1420 = vld [vmem:[#allocation2 + $0xd8] sm:$0xff]
      %v1421 = vld [vmem:[#allocation2 + $0xe0] sm:$0xff]
      %v1422 = vld [vmem:[#allocation2 + $0xe8] sm:$0xff]
      %v1423 = vld [vmem:[#allocation2 + $0xf0] sm:$0xff]
      %v1424 = vld [vmem:[#allocation2 + $0xf8] sm:$0xff]
      %v1425 = vadd.f32 %v1393, %v1267
      %v1426 = vadd.f32 %v1394, %v1270
      %v1427 = vadd.f32 %v1395, %v1275
      %v1428 = vadd.f32 %v1396, %v1278
      %v1429 = vadd.f32 %v1397, %v1283
      %v1430 = vadd.f32 %v1398, %v1286
      %v1431 = vadd.f32 %v1399, %v1291
      %v1432 = vadd.f32 %v1400, %v1294
      %v1433 = vadd.f32 %v1401, %v1299
      %v1434 = vadd.f32 %v1402, %v1302
      %v1435 = vadd.f32 %v1403, %v1307
      %v1436 = vadd.f32 %v1404, %v1310
      %v1437 = vadd.f32 %v1405, %v1315
      %v1438 = vadd.f32 %v1406, %v1318
      %v1439 = vadd.f32 %v1407, %v1323
      %v1440 = vadd.f32 %v1408, %v1326
      %v1441 = vadd.f32 %v1409, %v1331
      %v1442 = vadd.f32 %v1410, %v1334
      %v1443 = vadd.f32 %v1411, %v1339
      %v1444 = vadd.f32 %v1412, %v1342
      %v1445 = vadd.f32 %v1413, %v1347
      %v1446 = vadd.f32 %v1414, %v1350
      %v1447 = vadd.f32 %v1415, %v1355
      %v1448 = vadd.f32 %v1416, %v1358
      %v1449 = vadd.f32 %v1417, %v1363
      %v1450 = vadd.f32 %v1418, %v1366
      %v1451 = vadd.f32 %v1419, %v1371
      %v1452 = vadd.f32 %v1420, %v1374
      %v1453 = vadd.f32 %v1421, %v1379
      %v1454 = vadd.f32 %v1422, %v1382
      %v1455 = vadd.f32 %v1423, %v1387
      %v1456 = vadd.f32 %v1424, %v1390
      %1457 = vst [vmem:[#allocation2] sm:$0xff] %v1425
      %1458 = vst [vmem:[#allocation2 + $0x8] sm:$0xff] %v1426
      %1459 = vst [vmem:[#allocation2 + $0x10] sm:$0xff] %v1427
      %1460 = vst [vmem:[#allocation2 + $0x18] sm:$0xff] %v1428
      %1461 = vst [vmem:[#allocation2 + $0x20] sm:$0xff] %v1429
      %1462 = vst [vmem:[#allocation2 + $0x28] sm:$0xff] %v1430
      %1463 = vst [vmem:[#allocation2 + $0x30] sm:$0xff] %v1431
      %1464 = vst [vmem:[#allocation2 + $0x38] sm:$0xff] %v1432
      %1465 = vst [vmem:[#allocation2 + $0x40] sm:$0xff] %v1433
      %1466 = vst [vmem:[#allocation2 + $0x48] sm:$0xff] %v1434
      %1467 = vst [vmem:[#allocation2 + $0x50] sm:$0xff] %v1435
      %1468 = vst [vmem:[#allocation2 + $0x58] sm:$0xff] %v1436
      %1469 = vst [vmem:[#allocation2 + $0x60] sm:$0xff] %v1437
      %1470 = vst [vmem:[#allocation2 + $0x68] sm:$0xff] %v1438
      %1471 = vst [vmem:[#allocation2 + $0x70] sm:$0xff] %v1439
      %1472 = vst [vmem:[#allocation2 + $0x78] sm:$0xff] %v1440
      %1473 = vst [vmem:[#allocation2 + $0x80] sm:$0xff] %v1441
      %1474 = vst [vmem:[#allocation2 + $0x88] sm:$0xff] %v1442
      %1475 = vst [vmem:[#allocation2 + $0x90] sm:$0xff] %v1443
      %1476 = vst [vmem:[#allocation2 + $0x98] sm:$0xff] %v1444
      %1477 = vst [vmem:[#allocation2 + $0xa0] sm:$0xff] %v1445
      %1478 = vst [vmem:[#allocation2 + $0xa8] sm:$0xff] %v1446
      %1479 = vst [vmem:[#allocation2 + $0xb0] sm:$0xff] %v1447
      %1480 = vst [vmem:[#allocation2 + $0xb8] sm:$0xff] %v1448
      %1481 = vst [vmem:[#allocation2 + $0xc0] sm:$0xff] %v1449
      %1482 = vst [vmem:[#allocation2 + $0xc8] sm:$0xff] %v1450
      %1483 = vst [vmem:[#allocation2 + $0xd0] sm:$0xff] %v1451
      %1484 = vst [vmem:[#allocation2 + $0xd8] sm:$0xff] %v1452
      %1485 = vst [vmem:[#allocation2 + $0xe0] sm:$0xff] %v1453
      %1486 = vst [vmem:[#allocation2 + $0xe8] sm:$0xff] %v1454
      %1487 = vst [vmem:[#allocation2 + $0xf0] sm:$0xff] %v1455
      %1488 = vst [vmem:[#allocation2 + $0xf8] sm:$0xff] %v1456
      %v1489 = vld [vmem:[#allocation2] sm:$0xff]
      %v1490 = vld [vmem:[#allocation2 + $0x8] sm:$0xff]
      %v1491 = vld [vmem:[#allocation2 + $0x10] sm:$0xff]
      %v1492 = vld [vmem:[#allocation2 + $0x18] sm:$0xff]
      %v1493 = vld [vmem:[#allocation2 + $0x20] sm:$0xff]
      %v1494 = vld [vmem:[#allocation2 + $0x28] sm:$0xff]
      %v1495 = vld [vmem:[#allocation2 + $0x30] sm:$0xff]
      %v1496 = vld [vmem:[#allocation2 + $0x38] sm:$0xff]
      %v1497 = vld [vmem:[#allocation2 + $0x40] sm:$0xff]
      %v1498 = vld [vmem:[#allocation2 + $0x48] sm:$0xff]
      %v1499 = vld [vmem:[#allocation2 + $0x50] sm:$0xff]
      %v1500 = vld [vmem:[#allocation2 + $0x58] sm:$0xff]
      %v1501 = vld [vmem:[#allocation2 + $0x60] sm:$0xff]
      %v1502 = vld [vmem:[#allocation2 + $0x68] sm:$0xff]
      %v1503 = vld [vmem:[#allocation2 + $0x70] sm:$0xff]
      %v1504 = vld [vmem:[#allocation2 + $0x78] sm:$0xff]
      %v1505 = vld [vmem:[#allocation2 + $0x80] sm:$0xff]
      %v1506 = vld [vmem:[#allocation2 + $0x88] sm:$0xff]
      %v1507 = vld [vmem:[#allocation2 + $0x90] sm:$0xff]
      %v1508 = vld [vmem:[#allocation2 + $0x98] sm:$0xff]
      %v1509 = vld [vmem:[#allocation2 + $0xa0] sm:$0xff]
      %v1510 = vld [vmem:[#allocation2 + $0xa8] sm:$0xff]
      %v1511 = vld [vmem:[#allocation2 + $0xb0] sm:$0xff]
      %v1512 = vld [vmem:[#allocation2 + $0xb8] sm:$0xff]
      %v1513 = vld [vmem:[#allocation2 + $0xc0] sm:$0xff]
      %v1514 = vld [vmem:[#allocation2 + $0xc8] sm:$0xff]
      %v1515 = vld [vmem:[#allocation2 + $0xd0] sm:$0xff]
      %v1516 = vld [vmem:[#allocation2 + $0xd8] sm:$0xff]
      %v1517 = vld [vmem:[#allocation2 + $0xe0] sm:$0xff]
      %v1518 = vld [vmem:[#allocation2 + $0xe8] sm:$0xff]
      %v1519 = vld [vmem:[#allocation2 + $0xf0] sm:$0xff]
      %v1520 = vld [vmem:[#allocation2 + $0xf8] sm:$0xff]
      %v1521 = vpack.c.bf16 %v1490, %v1489
      %v1522 = vpack.c.bf16 %v1492, %v1491
      %v1523 = vpack.c.bf16 %v1494, %v1493
      %v1524 = vpack.c.bf16 %v1496, %v1495
      %v1525 = vpack.c.bf16 %v1498, %v1497
      %v1526 = vpack.c.bf16 %v1500, %v1499
      %v1527 = vpack.c.bf16 %v1502, %v1501
      %v1528 = vpack.c.bf16 %v1504, %v1503
      %v1529 = vpack.c.bf16 %v1506, %v1505
      %v1530 = vpack.c.bf16 %v1508, %v1507
      %v1531 = vpack.c.bf16 %v1510, %v1509
      %v1532 = vpack.c.bf16 %v1512, %v1511
      %v1533 = vpack.c.bf16 %v1514, %v1513
      %v1534 = vpack.c.bf16 %v1516, %v1515
      %v1535 = vpack.c.bf16 %v1518, %v1517
      %v1536 = vpack.c.bf16 %v1520, %v1519
      %v1553 = vunpack.c.l.b16 %v1521
      %v1554 = vunpack.c.h.b16 %v1521
      %v1555 = vunpack.c.l.b16 %v1522
      %v1556 = vunpack.c.h.b16 %v1522
      %v1557 = vunpack.c.l.b16 %v1523
      %v1558 = vunpack.c.h.b16 %v1523
      %v1559 = vunpack.c.l.b16 %v1524
      %v1560 = vunpack.c.h.b16 %v1524
      %v1561 = vunpack.c.l.b16 %v1525
      %v1562 = vunpack.c.h.b16 %v1525
      %v1563 = vunpack.c.l.b16 %v1526
      %v1564 = vunpack.c.h.b16 %v1526
      %v1565 = vunpack.c.l.b16 %v1527
      %v1566 = vunpack.c.h.b16 %v1527
      %v1567 = vunpack.c.l.b16 %v1528
      %v1568 = vunpack.c.h.b16 %v1528
      %v1569 = vunpack.c.l.b16 %v1529
      %v1570 = vunpack.c.h.b16 %v1529
      %v1571 = vunpack.c.l.b16 %v1530
      %v1572 = vunpack.c.h.b16 %v1530
      %v1573 = vunpack.c.l.b16 %v1531
      %v1574 = vunpack.c.h.b16 %v1531
      %v1575 = vunpack.c.l.b16 %v1532
      %v1576 = vunpack.c.h.b16 %v1532
      %v1577 = vunpack.c.l.b16 %v1533
      %v1578 = vunpack.c.h.b16 %v1533
      %v1579 = vunpack.c.l.b16 %v1534
      %v1580 = vunpack.c.h.b16 %v1534
      %v1581 = vunpack.c.l.b16 %v1535
      %v1582 = vunpack.c.h.b16 %v1535
      %v1583 = vunpack.c.l.b16 %v1536
      %v1584 = vunpack.c.h.b16 %v1536
      %v1585 = vpack.c.b16 %v1553, %v1553
      %v1586 = vpack.c.b16 %v1554, %v1554
      %v1587 = vpack.c.b16 %v1555, %v1555
      %v1588 = vpack.c.b16 %v1556, %v1556
      %v1589 = vpack.c.b16 %v1557, %v1557
      %v1590 = vpack.c.b16 %v1558, %v1558
      %v1591 = vpack.c.b16 %v1559, %v1559
      %v1592 = vpack.c.b16 %v1560, %v1560
      %v1593 = vpack.c.b16 %v1561, %v1561
      %v1594 = vpack.c.b16 %v1562, %v1562
      %v1595 = vpack.c.b16 %v1563, %v1563
      %v1596 = vpack.c.b16 %v1564, %v1564
      %v1597 = vpack.c.b16 %v1565, %v1565
      %v1598 = vpack.c.b16 %v1566, %v1566
      %v1599 = vpack.c.b16 %v1567, %v1567
      %v1600 = vpack.c.b16 %v1568, %v1568
      %v1601 = vpack.c.b16 %v1569, %v1569
      %v1602 = vpack.c.b16 %v1570, %v1570
      %v1603 = vpack.c.b16 %v1571, %v1571
      %v1604 = vpack.c.b16 %v1572, %v1572
      %v1605 = vpack.c.b16 %v1573, %v1573
      %v1606 = vpack.c.b16 %v1574, %v1574
      %v1607 = vpack.c.b16 %v1575, %v1575
      %v1608 = vpack.c.b16 %v1576, %v1576
      %v1609 = vpack.c.b16 %v1577, %v1577
      %v1610 = vpack.c.b16 %v1578, %v1578
      %v1611 = vpack.c.b16 %v1579, %v1579
      %v1612 = vpack.c.b16 %v1580, %v1580
      %v1613 = vpack.c.b16 %v1581, %v1581
      %v1614 = vpack.c.b16 %v1582, %v1582
      %v1615 = vpack.c.b16 %v1583, %v1583
      %v1616 = vpack.c.b16 %v1584, %v1584
      %1649 = vst [vmem:[%s243] sm:$0xf] %v1585
      %1650 = vst [vmem:[%s243 + $0x4] sm:$0xf] %v1586
      %1651 = vst [vmem:[%s243 + $0x8] sm:$0xf] %v1587
      %1652 = vst [vmem:[%s243 + $0xc] sm:$0xf] %v1588
      %1653 = vst [vmem:[%s243 + $0x10] sm:$0xf] %v1589
      %1654 = vst [vmem:[%s243 + $0x14] sm:$0xf] %v1590
      %1655 = vst [vmem:[%s243 + $0x18] sm:$0xf] %v1591
      %1656 = vst [vmem:[%s243 + $0x1c] sm:$0xf] %v1592
      %1657 = vst [vmem:[%s243 + $0x20] sm:$0xf] %v1593
      %1658 = vst [vmem:[%s243 + $0x24] sm:$0xf] %v1594
      %1659 = vst [vmem:[%s243 + $0x28] sm:$0xf] %v1595
      %1660 = vst [vmem:[%s243 + $0x2c] sm:$0xf] %v1596
      %1661 = vst [vmem:[%s243 + $0x30] sm:$0xf] %v1597
      %1662 = vst [vmem:[%s243 + $0x34] sm:$0xf] %v1598
      %1663 = vst [vmem:[%s243 + $0x38] sm:$0xf] %v1599
      %1664 = vst [vmem:[%s243 + $0x3c] sm:$0xf] %v1600
      %1665 = vst [vmem:[%s243 + $0x40] sm:$0xf] %v1601
      %1666 = vst [vmem:[%s243 + $0x44] sm:$0xf] %v1602
      %1667 = vst [vmem:[%s243 + $0x48] sm:$0xf] %v1603
      %1668 = vst [vmem:[%s243 + $0x4c] sm:$0xf] %v1604
      %1669 = vst [vmem:[%s243 + $0x50] sm:$0xf] %v1605
      %1670 = vst [vmem:[%s243 + $0x54] sm:$0xf] %v1606
      %1671 = vst [vmem:[%s243 + $0x58] sm:$0xf] %v1607
      %1672 = vst [vmem:[%s243 + $0x5c] sm:$0xf] %v1608
      %1673 = vst [vmem:[%s243 + $0x60] sm:$0xf] %v1609
      %1674 = vst [vmem:[%s243 + $0x64] sm:$0xf] %v1610
      %1675 = vst [vmem:[%s243 + $0x68] sm:$0xf] %v1611
      %1676 = vst [vmem:[%s243 + $0x6c] sm:$0xf] %v1612
      %1677 = vst [vmem:[%s243 + $0x70] sm:$0xf] %v1613
      %1678 = vst [vmem:[%s243 + $0x74] sm:$0xf] %v1614
      %1679 = vst [vmem:[%s243 + $0x78] sm:$0xf] %v1615
      %1680 = vst [vmem:[%s243 + $0x7c] sm:$0xf] %v1616
      %v1681 = vadd.f32 %v1489, %v1490
      %v1682 = vadd.f32 %v1681, %v1491
      %v1683 = vadd.f32 %v1682, %v1492
      %v1684 = vadd.f32 %v1683, %v1493
      %v1685 = vadd.f32 %v1684, %v1494
      %v1686 = vadd.f32 %v1685, %v1495
      %v1687 = vadd.f32 %v1686, %v1496
      %v1688 = vadd.f32 %v1687, %v1497
      %v1689 = vadd.f32 %v1688, %v1498
      %v1690 = vadd.f32 %v1689, %v1499
      %v1691 = vadd.f32 %v1690, %v1500
      %v1692 = vadd.f32 %v1691, %v1501
      %v1693 = vadd.f32 %v1692, %v1502
      %v1694 = vadd.f32 %v1693, %v1503
      %v1695 = vadd.f32 %v1694, %v1504
      %v1696 = vadd.f32 %v1695, %v1505
      %v1697 = vadd.f32 %v1696, %v1506
      %v1698 = vadd.f32 %v1697, %v1507
      %v1699 = vadd.f32 %v1698, %v1508
      %v1700 = vadd.f32 %v1699, %v1509
      %v1701 = vadd.f32 %v1700, %v1510
      %v1702 = vadd.f32 %v1701, %v1511
      %v1703 = vadd.f32 %v1702, %v1512
      %v1704 = vadd.f32 %v1703, %v1513
      %v1705 = vadd.f32 %v1704, %v1514
      %v1706 = vadd.f32 %v1705, %v1515
      %v1707 = vadd.f32 %v1706, %v1516
      %v1708 = vadd.f32 %v1707, %v1517
      %v1709 = vadd.f32 %v1708, %v1518
      %v1710 = vadd.f32 %v1709, %v1519
      %v1711 = vadd.f32 %v1710, %v1520
      %v1712 = vrot.slane %v1711, 4
      %v1713 = vadd.f32 %v1711, %v1712
      %v1714 = vrot.slane %v1713, 2
      %v1715 = vadd.f32 %v1713, %v1714
      %v1716 = vrot.slane %v1715, 1
      %v1717 = vadd.f32 %v1715, %v1716
      %v1718 = vmul.f32 %v1489, %v1489
      %v1719 = vmul.f32 %v1490, %v1490
      %v1720 = vmul.f32 %v1491, %v1491
      %v1721 = vmul.f32 %v1492, %v1492
      %v1722 = vmul.f32 %v1493, %v1493
      %v1723 = vmul.f32 %v1494, %v1494
      %v1724 = vmul.f32 %v1495, %v1495
      %v1725 = vmul.f32 %v1496, %v1496
      %v1726 = vmul.f32 %v1497, %v1497
      %v1727 = vmul.f32 %v1498, %v1498
      %v1728 = vmul.f32 %v1499, %v1499
      %v1729 = vmul.f32 %v1500, %v1500
      %v1730 = vmul.f32 %v1501, %v1501
      %v1731 = vmul.f32 %v1502, %v1502
      %v1732 = vmul.f32 %v1503, %v1503
      %v1733 = vmul.f32 %v1504, %v1504
      %v1734 = vmul.f32 %v1505, %v1505
      %v1735 = vmul.f32 %v1506, %v1506
      %v1736 = vmul.f32 %v1507, %v1507
      %v1737 = vmul.f32 %v1508, %v1508
      %v1738 = vmul.f32 %v1509, %v1509
      %v1739 = vmul.f32 %v1510, %v1510
      %v1740 = vmul.f32 %v1511, %v1511
      %v1741 = vmul.f32 %v1512, %v1512
      %v1742 = vmul.f32 %v1513, %v1513
      %v1743 = vmul.f32 %v1514, %v1514
      %v1744 = vmul.f32 %v1515, %v1515
      %v1745 = vmul.f32 %v1516, %v1516
      %v1746 = vmul.f32 %v1517, %v1517
      %v1747 = vmul.f32 %v1518, %v1518
      %v1748 = vmul.f32 %v1519, %v1519
      %v1749 = vmul.f32 %v1520, %v1520
      %v1750 = vadd.f32 %v1718, %v1719
      %v1751 = vadd.f32 %v1750, %v1720
      %v1752 = vadd.f32 %v1751, %v1721
      %v1753 = vadd.f32 %v1752, %v1722
      %v1754 = vadd.f32 %v1753, %v1723
      %v1755 = vadd.f32 %v1754, %v1724
      %v1756 = vadd.f32 %v1755, %v1725
      %v1757 = vadd.f32 %v1756, %v1726
      %v1758 = vadd.f32 %v1757, %v1727
      %v1759 = vadd.f32 %v1758, %v1728
      %v1760 = vadd.f32 %v1759, %v1729
      %v1761 = vadd.f32 %v1760, %v1730
      %v1762 = vadd.f32 %v1761, %v1731
      %v1763 = vadd.f32 %v1762, %v1732
      %v1764 = vadd.f32 %v1763, %v1733
      %v1765 = vadd.f32 %v1764, %v1734
      %v1766 = vadd.f32 %v1765, %v1735
      %v1767 = vadd.f32 %v1766, %v1736
      %v1768 = vadd.f32 %v1767, %v1737
      %v1769 = vadd.f32 %v1768, %v1738
      %v1770 = vadd.f32 %v1769, %v1739
      %v1771 = vadd.f32 %v1770, %v1740
      %v1772 = vadd.f32 %v1771, %v1741
      %v1773 = vadd.f32 %v1772, %v1742
      %v1774 = vadd.f32 %v1773, %v1743
      %v1775 = vadd.f32 %v1774, %v1744
      %v1776 = vadd.f32 %v1775, %v1745
      %v1777 = vadd.f32 %v1776, %v1746
      %v1778 = vadd.f32 %v1777, %v1747
      %v1779 = vadd.f32 %v1778, %v1748
      %v1780 = vadd.f32 %v1779, %v1749
      %v1781 = vrot.slane %v1780, 4
      %v1782 = vadd.f32 %v1780, %v1781
      %v1783 = vrot.slane %v1782, 2
      %v1784 = vadd.f32 %v1782, %v1783
      %v1785 = vrot.slane %v1784, 1
      %v1786 = vadd.f32 %v1784, %v1785
      %vm1787 = vcmask 1040384
      %v1788 = vsel %vm1787, %v1717, %v1786
      %1789 = vst [vmem:[%s254] sm:$0x3] %v1788
      %s1790 = smul.u32 16, %s22
      %p1791 = scmp.lt.s32.totalorder %s20, 1
      %s1792 = scalar_select %p1791, %s20, 1
      %p1793 = scmp.lt.s32.totalorder %s1790, 15
      %s1794 = scalar_select %p1793, %s1790, 15
      %p1795 = scmp.lt.s32.totalorder %s21, 0
      %s1796 = scalar_select %p1795, %s21, 0
      %s1797 = smul.addr %s1794, 2
      %s1798 = sadd.s32 %s1796, %s1797
      %s1799 = smul.addr %s1792, 32
      %s1800 = sadd.s32 %s1798, %s1799
      %s1801 = smul.addr %s1800, 4
      %s1802 = scalar_lea.vmem %s2, %s1801
      %p1803 = scmp.lt.s32.totalorder %s20, 1
      %s1804 = scalar_select %p1803, %s20, 1
      %p1805 = scmp.lt.s32.totalorder %s22, 0
      %s1806 = scalar_select %p1805, %s22, 0
      %p1807 = scmp.lt.s32.totalorder %s21, 0
      %s1808 = scalar_select %p1807, %s21, 0
      %s1809 = sadd.s32 %s1808, %s1806
      %s1810 = sadd.s32 %s1809, %s1804
      %s1811 = smul.addr %s1810, 2
      %s1812 = scalar_lea.vmem %s3, %s1811
      // Predicated region
      $region29: #{basic_conv2d.2} parent=27 // pred_check
        %p1813 = pneg %p108
      $region30: #{basic_conv2d.2} parent=27 // pred_check_branch
        %1815 = sbr.rel (%p1813) target = $region32
      $region31: #{basic_conv2d.2} parent=27 // pred_region
        %s1816 = smul.u32 16, %s22
      $region32: #{basic_conv2d.2} parent=27 // pred_fallthru
        _
      // Predicated region
      $region33: #{basic_conv2d.2} parent=27 // pred_check
        %p1817 = pneg %p138
      $region34: #{basic_conv2d.2} parent=27 // pred_check_branch
        %1819 = sbr.rel (%p1817) target = $region36
      $region35: #{basic_conv2d.2} parent=27 // pred_region
        _
      $region36: #{basic_conv2d.2} parent=27 // pred_fallthru
        _
    $region28: #{basic_conv2d.2} parent=5 // pred_fallthru
      _
    %p1820 = scmp.le.s32.totalorder 2, %s10
    // Predicated region
    $region37: #{basic_conv2d.2} parent=5 // pred_check
      %p1821 = pneg %p1820
    $region38: #{basic_conv2d.2} parent=5 // pred_check_branch
      %1823 = sbr.rel (%p1821) target = $region40
    $region39: #{basic_conv2d.2} parent=5 // pred_region
      %s1824 = ssub.s32 %s10, 2
      // Predicated region
      $region41: #{basic_conv2d.2} parent=39 // pred_check
        %p1825 = pneg %p114
      $region42: #{basic_conv2d.2} parent=39 // pred_check_branch
        %1827 = sbr.rel (%p1825) target = $region44
      $region43: #{basic_conv2d.2} parent=39 // pred_region
        %s1828 = smul.u32 16, %s25
        %p1829 = scmp.lt.s32.totalorder %s23, 1
        %s1830 = scalar_select %p1829, %s23, 1
        %p1831 = scmp.lt.s32.totalorder %s1828, 15
        %s1832 = scalar_select %p1831, %s1828, 15
        %p1833 = scmp.lt.s32.totalorder %s24, 0
        %s1834 = scalar_select %p1833, %s24, 0
        %s1835 = smul.addr %s1832, 2
        %s1836 = sadd.s32 %s1834, %s1835
        %s1837 = smul.addr %s1830, 32
        %s1838 = sadd.s32 %s1836, %s1837
        %s1839 = smul.addr %s1838, 4
        %s1840 = scalar_lea.vmem %s2, %s1839
      $region44: #{basic_conv2d.2} parent=39 // pred_fallthru
        _
      // Predicated region
      $region45: #{basic_conv2d.2} parent=39 // pred_check
        %p1841 = pneg %p144
      $region46: #{basic_conv2d.2} parent=39 // pred_check_branch
        %1843 = sbr.rel (%p1841) target = $region48
      $region47: #{basic_conv2d.2} parent=39 // pred_region
        %p1844 = scmp.lt.s32.totalorder %s23, 1
        %s1845 = scalar_select %p1844, %s23, 1
        %p1846 = scmp.lt.s32.totalorder %s25, 0
        %s1847 = scalar_select %p1846, %s25, 0
        %p1848 = scmp.lt.s32.totalorder %s24, 0
        %s1849 = scalar_select %p1848, %s24, 0
        %s1850 = sadd.s32 %s1849, %s1847
        %s1851 = sadd.s32 %s1850, %s1845
        %s1852 = smul.addr %s1851, 2
        %s1853 = scalar_lea.vmem %s3, %s1852
      $region48: #{basic_conv2d.2} parent=39 // pred_fallthru
        _
    $region40: #{basic_conv2d.2} parent=5 // pred_fallthru
      _
  $region6: #{basic_conv2d.2} parent=0 // loop_footer
    %s14 = sadd.s32 1, %s10
  $region7: #{basic_conv2d.2} parent=0 // loop_footer_branch
    %9 = sbr.rel target = $region3
  $region8: #{basic_conv2d.2} parent=0 // loop_exit
    _

</llo_original>
